<compile_context>
chip_gen: v5e
topology: v5e:2x2
jax: 0.10.0
libtpu: 0.0.40
codegen_flags: <defaults>
</compile_context>

<pallas_src>
import math

import jax
import jax.numpy as jnp
from jax.experimental import pallas as pl
from jax.experimental.pallas import tpu as pltpu  # noqa: F401  (kept for TPU-specific extensions)

# ----------------------- small synthetic BERT config -----------------------
VOCAB = 64
HIDDEN = 32
NUM_HEADS = 4
HEAD_DIM = HIDDEN // NUM_HEADS
NUM_LAYERS = 2
INTERMEDIATE = 64
MAX_POS = 64
TYPE_VOCAB = 2
LN_EPS = 1e-12


# ----------------------------- in-kernel helpers ----------------------------
def _layer_norm(x, gamma, beta):
    mu = jnp.mean(x, axis=-1, keepdims=True)
    xc = x - mu
    var = jnp.mean(xc * xc, axis=-1, keepdims=True)
    return xc * jax.lax.rsqrt(var + LN_EPS) * gamma + beta


def _gelu(x):
    # TODO(synk): original BERT uses erf-based GELU; tanh approximation used here.
    c = math.sqrt(2.0 / math.pi)
    return 0.5 * x * (1.0 + jnp.tanh(c * (x + 0.044715 * x * x * x)))


# ------------------------------- fused kernel -------------------------------
def summarizer_kernel(emb_ref, bias_ref, onehotT_ref, clsmisc_ref, embln_ref,
                      w1_ref, wo2_ref, b1_ref, lnp_ref, out_ref):
    """Single program: embedding LN + all encoder layers + gather + classifier."""
    BS, H = emb_ref.shape                      # (B*S, H) flattened activations
    NH, HD = NUM_HEADS, HEAD_DIM
    N = bias_ref.shape[0]                      # NH * B
    B = N // NH
    S = BS // B
    H3 = 3 * H

    bias = bias_ref[...]                       # (NH*B, 1, S) additive mask, hoisted
    eln = embln_ref[...]                       # (2, H): [gamma, beta]
    h0 = _layer_norm(emb_ref[...], eln[0:1], eln[1:2])

    def layer_body(l, h):
        w1 = w1_ref[l]                         # (H, 3H + H + I)
        wqkv = w1[:, :H3]
        wo = w1[:, H3:H3 + H]
        wi = w1[:, H3 + H:]
        b1 = b1_ref[l]                         # (1, 3H + I)
        bqkv, bi = b1[:, :H3], b1[:, H3:]
        lnp = lnp_ref[l]                       # (6, H): [bo, ln1g, ln1b, bo2, ln2g, ln2b]
        bo, ln1g, ln1b = lnp[0:1], lnp[1:2], lnp[2:3]
        bo2, ln2g, ln2b = lnp[3:4], lnp[4:5], lnp[5:6]

        # ---- fused QKV projection: one lane-dense (B*S, H) @ (H, 3H) matmul ----
        # (1/sqrt(HD) already folded into the q columns of wqkv/bqkv.)
        qkv = jnp.dot(h, wqkv, preferred_element_type=jnp.float32) + bqkv    # (BS, 3H)

        # ---- split heads onto one leading batch axis: n = head*B + batch ----
        qkvh = jnp.concatenate(
            [qkv[:, hh * 3 * HD:(hh + 1) * 3 * HD].reshape(B, S, 3 * HD)
             for hh in range(NH)], axis=0)                                   # (NH*B, S, 3HD)
        q = qkvh[:, :, :HD]
        k = qkvh[:, :, HD:2 * HD]
        v = qkvh[:, :, 2 * HD:]

        s = jnp.einsum('nqd,nkd->nqk', q, k,
                       preferred_element_type=jnp.float32) + bias            # (NH*B, S, S)
        s = s - jnp.max(s, axis=-1, keepdims=True)
        p = jnp.exp(s)
        p = p * pl.reciprocal(jnp.sum(p, axis=-1, keepdims=True), approx=True)
        ctx = jnp.einsum('nqk,nkd->nqd', p, v,
                         preferred_element_type=jnp.float32)                 # (NH*B, S, HD)

        # ---- concat heads back onto lanes, one (B*S, H) @ (H, H) out-proj ----
        ctx_cat = jnp.concatenate(
            [ctx[hh * B:(hh + 1) * B].reshape(BS, HD) for hh in range(NH)],
            axis=-1)                                                          # (BS, H)
        attn_out = jnp.dot(ctx_cat, wo, preferred_element_type=jnp.float32) + bo
        h1 = _layer_norm(h + attn_out, ln1g, ln1b)

        # ---- feed-forward on the flattened (B*S, H) activation ----
        ffn = jnp.dot(h1, wi, preferred_element_type=jnp.float32) + bi
        ffn = _gelu(ffn)
        ffn = jnp.dot(ffn, wo2_ref[l], preferred_element_type=jnp.float32) + bo2
        return _layer_norm(h1 + ffn, ln2g, ln2b)

    h = jax.lax.fori_loop(0, NUM_LAYERS, layer_body, h0, unroll=True)

    # ---- classifier applied BEFORE the gather (associativity); the sentence
    #      selection + mask_cls live in onehotT, so the output is produced as a
    #      single lane-dense (1, B*Nsent) matmul + store ----
    cm = clsmisc_ref[...]                      # (1, H + 1 + B*Nsent)
    cls_w = cm[:, :H]                          # (1, H)
    cls_b = cm[:, H:H + 1]                     # (1, 1)
    maskr = cm[:, H + 1:]                      # (1, B*Nsent)
    t_row = jnp.einsum('oh,sh->os', cls_w, h,
                       preferred_element_type=jnp.float32)                   # (1, B*S)
    logits = jnp.dot(t_row, onehotT_ref[...],
                     preferred_element_type=jnp.float32) + cls_b             # (1, B*Nsent)
    out_ref[...] = jax.nn.sigmoid(logits) * maskr                            # single store


# ------------------------------ pallas wrapper ------------------------------
def pallas_summarizer(emb_flat, attn_bias_n, onehotT, cls_misc, emb_ln, sp):
    """No grid: one program, all (tiny) arrays fully resident in VMEM."""
    bn = onehotT.shape[1]
    return pl.pallas_call(
        summarizer_kernel,
        out_shape=jax.ShapeDtypeStruct((1, bn), jnp.float32),
    )(emb_flat, attn_bias_n, onehotT, cls_misc, emb_ln,
      sp['w1'], sp['wo2'], sp['b1'], sp['lnp'])


# ------------------------------ parameter setup ------------------------------
def init_params(key):
    def nrm(k, shape):
        return 0.02 * jax.random.normal(k, shape, dtype=jnp.float32)

    keys = iter(jax.random.split(key, 64))
    params = {
        'word_emb': nrm(next(keys), (VOCAB, HIDDEN)),
        'pos_emb': nrm(next(keys), (MAX_POS, HIDDEN)),
        'type_emb': nrm(next(keys), (TYPE_VOCAB, HIDDEN)),
        'emb_ln_g': jnp.ones((1, HIDDEN), jnp.float32),
        'emb_ln_b': jnp.zeros((1, HIDDEN), jnp.float32),
        'layers': [],
        'cls_w': nrm(next(keys), (HIDDEN, 1)),
        'cls_b': jnp.zeros((1, 1), jnp.float32),
    }
    for _ in range(NUM_LAYERS):
        lp = {
            'wq': nrm(next(keys), (HIDDEN, HIDDEN)), 'bq': jnp.zeros((1, HIDDEN), jnp.float32),
            'wk': nrm(next(keys), (HIDDEN, HIDDEN)), 'bk': jnp.zeros((1, HIDDEN), jnp.float32),
            'wv': nrm(next(keys), (HIDDEN, HIDDEN)), 'bv': jnp.zeros((1, HIDDEN), jnp.float32),
            'wo': nrm(next(keys), (HIDDEN, HIDDEN)), 'bo': jnp.zeros((1, HIDDEN), jnp.float32),
            'ln1_g': jnp.ones((1, HIDDEN), jnp.float32), 'ln1_b': jnp.zeros((1, HIDDEN), jnp.float32),
            'wi': nrm(next(keys), (HIDDEN, INTERMEDIATE)), 'bi': jnp.zeros((1, INTERMEDIATE), jnp.float32),
            'wo2': nrm(next(keys), (INTERMEDIATE, HIDDEN)), 'bo2': jnp.zeros((1, HIDDEN), jnp.float32),
            'ln2_g': jnp.ones((1, HIDDEN), jnp.float32), 'ln2_b': jnp.zeros((1, HIDDEN), jnp.float32),
        }
        params['layers'].append(lp)
    return params


def stack_layer_params(layers):
    """Merge per-layer params into 4 stacked refs.

    w1  : (L, H, 3H + H + I)  columns = [Wqkv (head-major q|k|v) | Wo | Wi]
    wo2 : (L, I, H)
    b1  : (L, 1, 3H + I)      columns = [bqkv (head-major q|k|v) | bi]
    lnp : (L, 6, H)           rows    = [bo, ln1g, ln1b, bo2, ln2g, ln2b]
    1/sqrt(HD) is folded into the q columns (weight and bias).
    All f32: at these shapes the MXU is not the bottleneck, so bf16 cast churn
    is dropped (reinstate bf16 weights+activations at production sizes).
    """
    HD = HEAD_DIM
    scale = 1.0 / math.sqrt(HD)
    w1, wo2, b1, lnp = [], [], [], []
    for lp in layers:
        wcols, bcols = [], []
        for hh in range(NUM_HEADS):
            sl = slice(hh * HD, (hh + 1) * HD)
            wcols += [lp['wq'][:, sl] * scale, lp['wk'][:, sl], lp['wv'][:, sl]]
            bcols += [lp['bq'][:, sl] * scale, lp['bk'][:, sl], lp['bv'][:, sl]]
        wqkv = jnp.concatenate(wcols, axis=1)                                # (H, 3H)
        w1.append(jnp.concatenate([wqkv, lp['wo'], lp['wi']], axis=1))       # (H, 3H+H+I)
        b1.append(jnp.concatenate(bcols + [lp['bi']], axis=1))               # (1, 3H+I)
        lnp.append(jnp.concatenate([lp['bo'], lp['ln1_g'], lp['ln1_b'],
                                    lp['bo2'], lp['ln2_g'], lp['ln2_b']], axis=0))  # (6, H)
        wo2.append(lp['wo2'])
    return {
        'w1': jnp.stack(w1).astype(jnp.float32),
        'wo2': jnp.stack(wo2).astype(jnp.float32),
        'b1': jnp.stack(b1).astype(jnp.float32),
        'lnp': jnp.stack(lnp).astype(jnp.float32),
    }


# -------------------------------- forward pass --------------------------------
def summarizer_forward(params, x_ids, segs, clss, mask, mask_cls):
    B, S = x_ids.shape
    nsent = clss.shape[1]

    # Embedding table gathers (plain-JAX glue), flattened to (B*S, H).
    we = params['word_emb'][x_ids]                                   # (B, S, H)
    pe = params['pos_emb'][jnp.arange(S)][None, :, :]                # (1, S, H)
    te = params['type_emb'][segs]                                    # (B, S, H)
    emb = (we + pe + te).astype(jnp.float32).reshape(B * S, HIDDEN)

    # Extended attention mask bias, pre-tiled over heads: n = head*B + batch.
    bias_b = ((1.0 - mask.astype(jnp.float32)) * -10000.0)[:, None, :]   # (B, 1, S)
    attn_bias_n = jnp.tile(bias_b, (NUM_HEADS, 1, 1))                    # (NH*B, 1, S)

    # Sentence-selection matrix (mask_cls folded in): onehotT[s, b*Nsent+n] =
    # mask_cls[b, n] if s == b*S + clss[b, n] else 0.
    mask_cls_f = mask_cls.astype(jnp.float32)
    flat_idx = (jnp.arange(B, dtype=jnp.int32)[:, None] * S
                + clss.astype(jnp.int32)).reshape(1, B * nsent)
    rows = jnp.arange(B * S, dtype=jnp.int32)[:, None]
    onehotT = (rows == flat_idx).astype(jnp.float32) * mask_cls_f.reshape(1, B * nsent)

    # Classifier weight/bias + mask_cls merged into one small lane-dense ref.
    cls_misc = jnp.concatenate([params['cls_w'].reshape(1, HIDDEN),
                                params['cls_b'].reshape(1, 1),
                                mask_cls_f.reshape(1, B * nsent)], axis=1)
    emb_ln = jnp.concatenate([params['emb_ln_g'], params['emb_ln_b']], axis=0)  # (2, H)

    sp = stack_layer_params(params['layers'])
    scores_row = pallas_summarizer(emb, attn_bias_n, onehotT, cls_misc, emb_ln, sp)
    sent_scores = scores_row.reshape(B, nsent)                       # free reshape in XLA
    return sent_scores, mask_cls


# ------------------------------------ main ------------------------------------
if __name__ == "__main__":
    key = jax.random.PRNGKey(0)
    pkey, xkey = jax.random.split(key)
    params = init_params(pkey)

    B, S, NSENT = 2, 8, 3
    x_ids = jax.random.randint(xkey, (B, S), 0, VOCAB, dtype=jnp.int32)
    segs = jnp.array([[0, 0, 0, 1, 1, 1, 1, 1],
                      [0, 0, 1, 1, 1, 1, 1, 1]], dtype=jnp.int32)
    mask = jnp.array([[1, 1, 1, 1, 1, 1, 1, 1],
                      [1, 1, 1, 1, 1, 1, 0, 0]], dtype=jnp.float32)
    clss = jnp.array([[0, 3, 6],
                      [0, 2, 5]], dtype=jnp.int32)
    mask_cls = jnp.array([[1.0, 1.0, 1.0],
                          [1.0, 1.0, 0.0]], dtype=jnp.float32)

    sent_scores, out_mask_cls = summarizer_forward(params, x_ids, segs, clss, mask, mask_cls)
    sent_scores = jax.block_until_ready(sent_scores)
    out_mask_cls = jax.block_until_ready(out_mask_cls)

    assert sent_scores.shape == (B, NSENT)
    assert out_mask_cls.shape == (B, NSENT)
    assert bool(jnp.all(jnp.isfinite(sent_scores)))
    print("KERNEL_OK")
</pallas_src>

<mosaic_0001>
module attributes {stable_mosaic.version = 11 : i64} {
  func.func @summarizer_kernel(%arg0: memref<16x32xf32, #tpu.memory_space<vmem>>, %arg1: memref<8x1x8xf32, #tpu.memory_space<vmem>>, %arg2: memref<16x6xf32, #tpu.memory_space<vmem>>, %arg3: memref<1x39xf32, #tpu.memory_space<vmem>>, %arg4: memref<2x32xf32, #tpu.memory_space<vmem>>, %arg5: memref<2x32x192xf32, #tpu.memory_space<vmem>>, %arg6: memref<2x64x32xf32, #tpu.memory_space<vmem>>, %arg7: memref<2x1x160xf32, #tpu.memory_space<vmem>>, %arg8: memref<2x6x32xf32, #tpu.memory_space<vmem>>, %arg9: memref<1x6xf32, #tpu.memory_space<vmem>>) attributes {dimension_semantics = [], scalar_prefetch = 0 : i64, scratch_operands = 0 : i64, tpu.core_type = #tpu.core_type<tc>} {
    %c0 = arith.constant 0 : index
    %c0_0 = arith.constant 0 : index
    %c0_1 = arith.constant 0 : index
    %0 = vector.load %arg1[%c0, %c0_0, %c0_1] : memref<8x1x8xf32, #tpu.memory_space<vmem>>, vector<8x1x8xf32>
    %c0_2 = arith.constant 0 : index
    %c0_3 = arith.constant 0 : index
    %1 = vector.load %arg4[%c0_2, %c0_3] : memref<2x32xf32, #tpu.memory_space<vmem>>, vector<2x32xf32>
    %c0_4 = arith.constant 0 : index
    %c0_5 = arith.constant 0 : index
    %2 = vector.load %arg0[%c0_4, %c0_5] : memref<16x32xf32, #tpu.memory_space<vmem>>, vector<16x32xf32>
    %3 = vector.extract_strided_slice %1 {offsets = [0, 0], sizes = [1, 32], strides = [1, 1]} : vector<2x32xf32> to vector<1x32xf32>
    %4 = vector.extract_strided_slice %1 {offsets = [1, 0], sizes = [1, 32], strides = [1, 1]} : vector<2x32xf32> to vector<1x32xf32>
    %cst = arith.constant dense<0.000000e+00> : vector<16xf32>
    %5 = vector.multi_reduction <add>, %2, %cst [1] : vector<16x32xf32> to vector<16xf32>
    %6 = vector.shape_cast %5 : vector<16xf32> to vector<16x1xf32>
    %cst_6 = arith.constant 3.200000e+01 : f32
    %7 = vector.broadcast %cst_6 : f32 to vector<16x1xf32>
    %8 = arith.divf %6, %7 : vector<16x1xf32>
    %9 = vector.broadcast %8 : vector<16x1xf32> to vector<16x32xf32>
    %10 = arith.subf %2, %9 : vector<16x32xf32>
    %11 = arith.mulf %10, %10 : vector<16x32xf32>
    %cst_7 = arith.constant dense<0.000000e+00> : vector<16xf32>
    %12 = vector.multi_reduction <add>, %11, %cst_7 [1] : vector<16x32xf32> to vector<16xf32>
    %13 = vector.shape_cast %12 : vector<16xf32> to vector<16x1xf32>
    %cst_8 = arith.constant 3.200000e+01 : f32
    %14 = vector.broadcast %cst_8 : f32 to vector<16x1xf32>
    %15 = arith.divf %13, %14 : vector<16x1xf32>
    %cst_9 = arith.constant 9.99999996E-13 : f32
    %16 = vector.broadcast %cst_9 : f32 to vector<16x1xf32>
    %17 = arith.addf %15, %16 : vector<16x1xf32>
    %18 = math.rsqrt %17 : vector<16x1xf32>
    %19 = vector.broadcast %18 : vector<16x1xf32> to vector<16x32xf32>
    %20 = arith.mulf %10, %19 : vector<16x32xf32>
    %21 = vector.broadcast %3 : vector<1x32xf32> to vector<16x32xf32>
    %22 = arith.mulf %20, %21 : vector<16x32xf32>
    %23 = vector.broadcast %4 : vector<1x32xf32> to vector<16x32xf32>
    %24 = arith.addf %22, %23 : vector<16x32xf32>
    %c0_i32 = arith.constant 0 : i32
    %25 = arith.index_cast %c0_i32 : i32 to index
    %c0_10 = arith.constant 0 : index
    %c0_11 = arith.constant 0 : index
    %26 = vector.load %arg5[%25, %c0_10, %c0_11] : memref<2x32x192xf32, #tpu.memory_space<vmem>>, vector<1x32x192xf32>
    %27 = vector.shape_cast %26 : vector<1x32x192xf32> to vector<32x192xf32>
    %28 = vector.extract_strided_slice %27 {offsets = [0, 0], sizes = [32, 96], strides = [1, 1]} : vector<32x192xf32> to vector<32x96xf32>
    %29 = vector.extract_strided_slice %27 {offsets = [0, 96], sizes = [32, 32], strides = [1, 1]} : vector<32x192xf32> to vector<32x32xf32>
    %30 = vector.extract_strided_slice %27 {offsets = [0, 128], sizes = [32, 64], strides = [1, 1]} : vector<32x192xf32> to vector<32x64xf32>
    %31 = arith.index_cast %c0_i32 : i32 to index
    %c0_12 = arith.constant 0 : index
    %c0_13 = arith.constant 0 : index
    %32 = vector.load %arg7[%31, %c0_12, %c0_13] : memref<2x1x160xf32, #tpu.memory_space<vmem>>, vector<1x1x160xf32>
    %33 = vector.shape_cast %32 : vector<1x1x160xf32> to vector<1x160xf32>
    %34 = vector.extract_strided_slice %33 {offsets = [0, 0], sizes = [1, 96], strides = [1, 1]} : vector<1x160xf32> to vector<1x96xf32>
    %35 = vector.extract_strided_slice %33 {offsets = [0, 96], sizes = [1, 64], strides = [1, 1]} : vector<1x160xf32> to vector<1x64xf32>
    %36 = arith.index_cast %c0_i32 : i32 to index
    %c0_14 = arith.constant 0 : index
    %c0_15 = arith.constant 0 : index
    %37 = vector.load %arg8[%36, %c0_14, %c0_15] : memref<2x6x32xf32, #tpu.memory_space<vmem>>, vector<1x6x32xf32>
    %38 = vector.shape_cast %37 : vector<1x6x32xf32> to vector<6x32xf32>
    %39 = vector.extract_strided_slice %38 {offsets = [0, 0], sizes = [1, 32], strides = [1, 1]} : vector<6x32xf32> to vector<1x32xf32>
    %40 = vector.extract_strided_slice %38 {offsets = [1, 0], sizes = [1, 32], strides = [1, 1]} : vector<6x32xf32> to vector<1x32xf32>
    %41 = vector.extract_strided_slice %38 {offsets = [2, 0], sizes = [1, 32], strides = [1, 1]} : vector<6x32xf32> to vector<1x32xf32>
    %42 = vector.extract_strided_slice %38 {offsets = [3, 0], sizes = [1, 32], strides = [1, 1]} : vector<6x32xf32> to vector<1x32xf32>
    %43 = vector.extract_strided_slice %38 {offsets = [4, 0], sizes = [1, 32], strides = [1, 1]} : vector<6x32xf32> to vector<1x32xf32>
    %44 = vector.extract_strided_slice %38 {offsets = [5, 0], sizes = [1, 32], strides = [1, 1]} : vector<6x32xf32> to vector<1x32xf32>
    %cst_16 = arith.constant dense<0.000000e+00> : vector<16x96xf32>
    %45 = tpu.matmul %24, %28, %cst_16 {dimension_numbers = #tpu.dot_dimension_numbers<[1], [0], [0], [1], [0, 0, 1, 1], [], []>} : vector<16x32xf32>, vector<32x96xf32>, vector<16x96xf32> -> vector<16x96xf32>
    %46 = vector.broadcast %34 : vector<1x96xf32> to vector<16x96xf32>
    %47 = arith.addf %45, %46 : vector<16x96xf32>
    %48 = vector.extract_strided_slice %47 {offsets = [0, 0], sizes = [16, 24], strides = [1, 1]} : vector<16x96xf32> to vector<16x24xf32>
    %49 = vector.shape_cast %48 : vector<16x24xf32> to vector<2x8x24xf32>
    %50 = vector.extract_strided_slice %47 {offsets = [0, 24], sizes = [16, 24], strides = [1, 1]} : vector<16x96xf32> to vector<16x24xf32>
    %51 = vector.shape_cast %50 : vector<16x24xf32> to vector<2x8x24xf32>
    %52 = vector.extract_strided_slice %47 {offsets = [0, 48], sizes = [16, 24], strides = [1, 1]} : vector<16x96xf32> to vector<16x24xf32>
    %53 = vector.shape_cast %52 : vector<16x24xf32> to vector<2x8x24xf32>
    %54 = vector.extract_strided_slice %47 {offsets = [0, 72], sizes = [16, 24], strides = [1, 1]} : vector<16x96xf32> to vector<16x24xf32>
    %55 = vector.shape_cast %54 : vector<16x24xf32> to vector<2x8x24xf32>
    %56 = tpu.concatenate %49, %51, %53, %55 in 0 : vector<2x8x24xf32>, vector<2x8x24xf32>, vector<2x8x24xf32>, vector<2x8x24xf32> -> vector<8x8x24xf32>
    %57 = vector.extract_strided_slice %56 {offsets = [0, 0, 0], sizes = [8, 8, 8], strides = [1, 1, 1]} : vector<8x8x24xf32> to vector<8x8x8xf32>
    %58 = vector.extract_strided_slice %56 {offsets = [0, 0, 8], sizes = [8, 8, 8], strides = [1, 1, 1]} : vector<8x8x24xf32> to vector<8x8x8xf32>
    %59 = vector.extract_strided_slice %56 {offsets = [0, 0, 16], sizes = [8, 8, 8], strides = [1, 1, 1]} : vector<8x8x24xf32> to vector<8x8x8xf32>
    "tpu.trace_start"() <{level = 10 : i32, message = "nqd,nkd->nqk"}> : () -> ()
    %cst_17 = arith.constant dense<0.000000e+00> : vector<8x8x8xf32>
    %60 = tpu.matmul %57, %58, %cst_17 {dimension_numbers = #tpu.dot_dimension_numbers<[2], [2], [1], [1], [0, 0, 0, 1, 1, 1], [0], [0]>} : vector<8x8x8xf32>, vector<8x8x8xf32>, vector<8x8x8xf32> -> vector<8x8x8xf32>
    "tpu.trace_stop"() : () -> ()
    %61 = vector.broadcast %0 : vector<8x1x8xf32> to vector<8x8x8xf32>
    %62 = arith.addf %60, %61 : vector<8x8x8xf32>
    %cst_18 = arith.constant dense<0xFF800000> : vector<8x8xf32>
    %63 = vector.multi_reduction <maximumf>, %62, %cst_18 [2] : vector<8x8x8xf32> to vector<8x8xf32>
    %64 = vector.shape_cast %63 : vector<8x8xf32> to vector<8x8x1xf32>
    %65 = vector.broadcast %64 : vector<8x8x1xf32> to vector<8x8x8xf32>
    %66 = arith.subf %62, %65 : vector<8x8x8xf32>
    %67 = math.exp %66 : vector<8x8x8xf32>
    %cst_19 = arith.constant dense<0.000000e+00> : vector<8x8xf32>
    %68 = vector.multi_reduction <add>, %67, %cst_19 [2] : vector<8x8x8xf32> to vector<8x8xf32>
    %69 = vector.shape_cast %68 : vector<8x8xf32> to vector<8x8x1xf32>
    %70 = tpu.reciprocal %69 {approx = true} : vector<8x8x1xf32> -> vector<8x8x1xf32>
    %71 = vector.broadcast %70 : vector<8x8x1xf32> to vector<8x8x8xf32>
    %72 = arith.mulf %67, %71 : vector<8x8x8xf32>
    "tpu.trace_start"() <{level = 10 : i32, message = "nqk,nkd->nqd"}> : () -> ()
    %cst_20 = arith.constant dense<0.000000e+00> : vector<8x8x8xf32>
    %73 = tpu.matmul %72, %59, %cst_20 {dimension_numbers = #tpu.dot_dimension_numbers<[2], [1], [1], [2], [0, 0, 0, 1, 1, 2], [0], [0]>} : vector<8x8x8xf32>, vector<8x8x8xf32>, vector<8x8x8xf32> -> vector<8x8x8xf32>
    "tpu.trace_stop"() : () -> ()
    %74 = vector.extract_strided_slice %73 {offsets = [0, 0, 0], sizes = [2, 8, 8], strides = [1, 1, 1]} : vector<8x8x8xf32> to vector<2x8x8xf32>
    %75 = vector.shape_cast %74 : vector<2x8x8xf32> to vector<16x8xf32>
    %76 = vector.extract_strided_slice %73 {offsets = [2, 0, 0], sizes = [2, 8, 8], strides = [1, 1, 1]} : vector<8x8x8xf32> to vector<2x8x8xf32>
    %77 = vector.shape_cast %76 : vector<2x8x8xf32> to vector<16x8xf32>
    %78 = vector.extract_strided_slice %73 {offsets = [4, 0, 0], sizes = [2, 8, 8], strides = [1, 1, 1]} : vector<8x8x8xf32> to vector<2x8x8xf32>
    %79 = vector.shape_cast %78 : vector<2x8x8xf32> to vector<16x8xf32>
    %80 = vector.extract_strided_slice %73 {offsets = [6, 0, 0], sizes = [2, 8, 8], strides = [1, 1, 1]} : vector<8x8x8xf32> to vector<2x8x8xf32>
    %81 = vector.shape_cast %80 : vector<2x8x8xf32> to vector<16x8xf32>
    %82 = tpu.concatenate %75, %77, %79, %81 in 1 : vector<16x8xf32>, vector<16x8xf32>, vector<16x8xf32>, vector<16x8xf32> -> vector<16x32xf32>
    %cst_21 = arith.constant dense<0.000000e+00> : vector<16x32xf32>
    %83 = tpu.matmul %82, %29, %cst_21 {dimension_numbers = #tpu.dot_dimension_numbers<[1], [0], [0], [1], [0, 0, 1, 1], [], []>} : vector<16x32xf32>, vector<32x32xf32>, vector<16x32xf32> -> vector<16x32xf32>
    %84 = vector.broadcast %39 : vector<1x32xf32> to vector<16x32xf32>
    %85 = arith.addf %83, %84 : vector<16x32xf32>
    %86 = arith.addf %24, %85 : vector<16x32xf32>
    %cst_22 = arith.constant dense<0.000000e+00> : vector<16xf32>
    %87 = vector.multi_reduction <add>, %86, %cst_22 [1] : vector<16x32xf32> to vector<16xf32>
    %88 = vector.shape_cast %87 : vector<16xf32> to vector<16x1xf32>
    %cst_23 = arith.constant 3.200000e+01 : f32
    %89 = vector.broadcast %cst_23 : f32 to vector<16x1xf32>
    %90 = arith.divf %88, %89 : vector<16x1xf32>
    %91 = vector.broadcast %90 : vector<16x1xf32> to vector<16x32xf32>
    %92 = arith.subf %86, %91 : vector<16x32xf32>
    %93 = arith.mulf %92, %92 : vector<16x32xf32>
    %cst_24 = arith.constant dense<0.000000e+00> : vector<16xf32>
    %94 = vector.multi_reduction <add>, %93, %cst_24 [1] : vector<16x32xf32> to vector<16xf32>
    %95 = vector.shape_cast %94 : vector<16xf32> to vector<16x1xf32>
    %cst_25 = arith.constant 3.200000e+01 : f32
    %96 = vector.broadcast %cst_25 : f32 to vector<16x1xf32>
    %97 = arith.divf %95, %96 : vector<16x1xf32>
    %cst_26 = arith.constant 9.99999996E-13 : f32
    %98 = vector.broadcast %cst_26 : f32 to vector<16x1xf32>
    %99 = arith.addf %97, %98 : vector<16x1xf32>
    %100 = math.rsqrt %99 : vector<16x1xf32>
    %101 = vector.broadcast %100 : vector<16x1xf32> to vector<16x32xf32>
    %102 = arith.mulf %92, %101 : vector<16x32xf32>
    %103 = vector.broadcast %40 : vector<1x32xf32> to vector<16x32xf32>
    %104 = arith.mulf %102, %103 : vector<16x32xf32>
    %105 = vector.broadcast %41 : vector<1x32xf32> to vector<16x32xf32>
    %106 = arith.addf %104, %105 : vector<16x32xf32>
    %cst_27 = arith.constant dense<0.000000e+00> : vector<16x64xf32>
    %107 = tpu.matmul %106, %30, %cst_27 {dimension_numbers = #tpu.dot_dimension_numbers<[1], [0], [0], [1], [0, 0, 1, 1], [], []>} : vector<16x32xf32>, vector<32x64xf32>, vector<16x64xf32> -> vector<16x64xf32>
    %108 = vector.broadcast %35 : vector<1x64xf32> to vector<16x64xf32>
    %109 = arith.addf %107, %108 : vector<16x64xf32>
    %cst_28 = arith.constant 5.000000e-01 : f32
    %110 = vector.broadcast %cst_28 : f32 to vector<16x64xf32>
    %111 = arith.mulf %110, %109 : vector<16x64xf32>
    %cst_29 = arith.constant 4.471500e-02 : f32
    %112 = vector.broadcast %cst_29 : f32 to vector<16x64xf32>
    %113 = arith.mulf %112, %109 : vector<16x64xf32>
    %114 = arith.mulf %113, %109 : vector<16x64xf32>
    %115 = arith.mulf %114, %109 : vector<16x64xf32>
    %116 = arith.addf %109, %115 : vector<16x64xf32>
    %cst_30 = arith.constant 0.797884583 : f32
    %117 = vector.broadcast %cst_30 : f32 to vector<16x64xf32>
    %118 = arith.mulf %117, %116 : vector<16x64xf32>
    %119 = math.tanh %118 : vector<16x64xf32>
    %cst_31 = arith.constant 1.000000e+00 : f32
    %120 = vector.broadcast %cst_31 : f32 to vector<16x64xf32>
    %121 = arith.addf %120, %119 : vector<16x64xf32>
    %122 = arith.mulf %111, %121 : vector<16x64xf32>
    %123 = arith.index_cast %c0_i32 : i32 to index
    %c0_32 = arith.constant 0 : index
    %c0_33 = arith.constant 0 : index
    %124 = vector.load %arg6[%123, %c0_32, %c0_33] : memref<2x64x32xf32, #tpu.memory_space<vmem>>, vector<1x64x32xf32>
    %125 = vector.shape_cast %124 : vector<1x64x32xf32> to vector<64x32xf32>
    %cst_34 = arith.constant dense<0.000000e+00> : vector<16x32xf32>
    %126 = tpu.matmul %122, %125, %cst_34 {dimension_numbers = #tpu.dot_dimension_numbers<[1], [0], [0], [1], [0, 0, 1, 1], [], []>} : vector<16x64xf32>, vector<64x32xf32>, vector<16x32xf32> -> vector<16x32xf32>
    %127 = vector.broadcast %42 : vector<1x32xf32> to vector<16x32xf32>
    %128 = arith.addf %126, %127 : vector<16x32xf32>
    %129 = arith.addf %106, %128 : vector<16x32xf32>
    %cst_35 = arith.constant dense<0.000000e+00> : vector<16xf32>
    %130 = vector.multi_reduction <add>, %129, %cst_35 [1] : vector<16x32xf32> to vector<16xf32>
    %131 = vector.shape_cast %130 : vector<16xf32> to vector<16x1xf32>
    %cst_36 = arith.constant 3.200000e+01 : f32
    %132 = vector.broadcast %cst_36 : f32 to vector<16x1xf32>
    %133 = arith.divf %131, %132 : vector<16x1xf32>
    %134 = vector.broadcast %133 : vector<16x1xf32> to vector<16x32xf32>
    %135 = arith.subf %129, %134 : vector<16x32xf32>
    %136 = arith.mulf %135, %135 : vector<16x32xf32>
    %cst_37 = arith.constant dense<0.000000e+00> : vector<16xf32>
    %137 = vector.multi_reduction <add>, %136, %cst_37 [1] : vector<16x32xf32> to vector<16xf32>
    %138 = vector.shape_cast %137 : vector<16xf32> to vector<16x1xf32>
    %cst_38 = arith.constant 3.200000e+01 : f32
    %139 = vector.broadcast %cst_38 : f32 to vector<16x1xf32>
    %140 = arith.divf %138, %139 : vector<16x1xf32>
    %cst_39 = arith.constant 9.99999996E-13 : f32
    %141 = vector.broadcast %cst_39 : f32 to vector<16x1xf32>
    %142 = arith.addf %140, %141 : vector<16x1xf32>
    %143 = math.rsqrt %142 : vector<16x1xf32>
    %144 = vector.broadcast %143 : vector<16x1xf32> to vector<16x32xf32>
    %145 = arith.mulf %135, %144 : vector<16x32xf32>
    %146 = vector.broadcast %43 : vector<1x32xf32> to vector<16x32xf32>
    %147 = arith.mulf %145, %146 : vector<16x32xf32>
    %148 = vector.broadcast %44 : vector<1x32xf32> to vector<16x32xf32>
    %149 = arith.addf %147, %148 : vector<16x32xf32>
    %c1_i32 = arith.constant 1 : i32
    %150 = arith.index_cast %c1_i32 : i32 to index
    %c0_40 = arith.constant 0 : index
    %c0_41 = arith.constant 0 : index
    %151 = vector.load %arg5[%150, %c0_40, %c0_41] : memref<2x32x192xf32, #tpu.memory_space<vmem>>, vector<1x32x192xf32>
    %152 = vector.shape_cast %151 : vector<1x32x192xf32> to vector<32x192xf32>
    %153 = vector.extract_strided_slice %152 {offsets = [0, 0], sizes = [32, 96], strides = [1, 1]} : vector<32x192xf32> to vector<32x96xf32>
    %154 = vector.extract_strided_slice %152 {offsets = [0, 96], sizes = [32, 32], strides = [1, 1]} : vector<32x192xf32> to vector<32x32xf32>
    %155 = vector.extract_strided_slice %152 {offsets = [0, 128], sizes = [32, 64], strides = [1, 1]} : vector<32x192xf32> to vector<32x64xf32>
    %156 = arith.index_cast %c1_i32 : i32 to index
    %c0_42 = arith.constant 0 : index
    %c0_43 = arith.constant 0 : index
    %157 = vector.load %arg7[%156, %c0_42, %c0_43] : memref<2x1x160xf32, #tpu.memory_space<vmem>>, vector<1x1x160xf32>
    %158 = vector.shape_cast %157 : vector<1x1x160xf32> to vector<1x160xf32>
    %159 = vector.extract_strided_slice %158 {offsets = [0, 0], sizes = [1, 96], strides = [1, 1]} : vector<1x160xf32> to vector<1x96xf32>
    %160 = vector.extract_strided_slice %158 {offsets = [0, 96], sizes = [1, 64], strides = [1, 1]} : vector<1x160xf32> to vector<1x64xf32>
    %161 = arith.index_cast %c1_i32 : i32 to index
    %c0_44 = arith.constant 0 : index
    %c0_45 = arith.constant 0 : index
    %162 = vector.load %arg8[%161, %c0_44, %c0_45] : memref<2x6x32xf32, #tpu.memory_space<vmem>>, vector<1x6x32xf32>
    %163 = vector.shape_cast %162 : vector<1x6x32xf32> to vector<6x32xf32>
    %164 = vector.extract_strided_slice %163 {offsets = [0, 0], sizes = [1, 32], strides = [1, 1]} : vector<6x32xf32> to vector<1x32xf32>
    %165 = vector.extract_strided_slice %163 {offsets = [1, 0], sizes = [1, 32], strides = [1, 1]} : vector<6x32xf32> to vector<1x32xf32>
    %166 = vector.extract_strided_slice %163 {offsets = [2, 0], sizes = [1, 32], strides = [1, 1]} : vector<6x32xf32> to vector<1x32xf32>
    %167 = vector.extract_strided_slice %163 {offsets = [3, 0], sizes = [1, 32], strides = [1, 1]} : vector<6x32xf32> to vector<1x32xf32>
    %168 = vector.extract_strided_slice %163 {offsets = [4, 0], sizes = [1, 32], strides = [1, 1]} : vector<6x32xf32> to vector<1x32xf32>
    %169 = vector.extract_strided_slice %163 {offsets = [5, 0], sizes = [1, 32], strides = [1, 1]} : vector<6x32xf32> to vector<1x32xf32>
    %cst_46 = arith.constant dense<0.000000e+00> : vector<16x96xf32>
    %170 = tpu.matmul %149, %153, %cst_46 {dimension_numbers = #tpu.dot_dimension_numbers<[1], [0], [0], [1], [0, 0, 1, 1], [], []>} : vector<16x32xf32>, vector<32x96xf32>, vector<16x96xf32> -> vector<16x96xf32>
    %171 = vector.broadcast %159 : vector<1x96xf32> to vector<16x96xf32>
    %172 = arith.addf %170, %171 : vector<16x96xf32>
    %173 = vector.extract_strided_slice %172 {offsets = [0, 0], sizes = [16, 24], strides = [1, 1]} : vector<16x96xf32> to vector<16x24xf32>
    %174 = vector.shape_cast %173 : vector<16x24xf32> to vector<2x8x24xf32>
    %175 = vector.extract_strided_slice %172 {offsets = [0, 24], sizes = [16, 24], strides = [1, 1]} : vector<16x96xf32> to vector<16x24xf32>
    %176 = vector.shape_cast %175 : vector<16x24xf32> to vector<2x8x24xf32>
    %177 = vector.extract_strided_slice %172 {offsets = [0, 48], sizes = [16, 24], strides = [1, 1]} : vector<16x96xf32> to vector<16x24xf32>
    %178 = vector.shape_cast %177 : vector<16x24xf32> to vector<2x8x24xf32>
    %179 = vector.extract_strided_slice %172 {offsets = [0, 72], sizes = [16, 24], strides = [1, 1]} : vector<16x96xf32> to vector<16x24xf32>
    %180 = vector.shape_cast %179 : vector<16x24xf32> to vector<2x8x24xf32>
    %181 = tpu.concatenate %174, %176, %178, %180 in 0 : vector<2x8x24xf32>, vector<2x8x24xf32>, vector<2x8x24xf32>, vector<2x8x24xf32> -> vector<8x8x24xf32>
    %182 = vector.extract_strided_slice %181 {offsets = [0, 0, 0], sizes = [8, 8, 8], strides = [1, 1, 1]} : vector<8x8x24xf32> to vector<8x8x8xf32>
    %183 = vector.extract_strided_slice %181 {offsets = [0, 0, 8], sizes = [8, 8, 8], strides = [1, 1, 1]} : vector<8x8x24xf32> to vector<8x8x8xf32>
    %184 = vector.extract_strided_slice %181 {offsets = [0, 0, 16], sizes = [8, 8, 8], strides = [1, 1, 1]} : vector<8x8x24xf32> to vector<8x8x8xf32>
    "tpu.trace_start"() <{level = 10 : i32, message = "nqd,nkd->nqk"}> : () -> ()
    %cst_47 = arith.constant dense<0.000000e+00> : vector<8x8x8xf32>
    %185 = tpu.matmul %182, %183, %cst_47 {dimension_numbers = #tpu.dot_dimension_numbers<[2], [2], [1], [1], [0, 0, 0, 1, 1, 1], [0], [0]>} : vector<8x8x8xf32>, vector<8x8x8xf32>, vector<8x8x8xf32> -> vector<8x8x8xf32>
    "tpu.trace_stop"() : () -> ()
    %186 = vector.broadcast %0 : vector<8x1x8xf32> to vector<8x8x8xf32>
    %187 = arith.addf %185, %186 : vector<8x8x8xf32>
    %cst_48 = arith.constant dense<0xFF800000> : vector<8x8xf32>
    %188 = vector.multi_reduction <maximumf>, %187, %cst_48 [2] : vector<8x8x8xf32> to vector<8x8xf32>
    %189 = vector.shape_cast %188 : vector<8x8xf32> to vector<8x8x1xf32>
    %190 = vector.broadcast %189 : vector<8x8x1xf32> to vector<8x8x8xf32>
    %191 = arith.subf %187, %190 : vector<8x8x8xf32>
    %192 = math.exp %191 : vector<8x8x8xf32>
    %cst_49 = arith.constant dense<0.000000e+00> : vector<8x8xf32>
    %193 = vector.multi_reduction <add>, %192, %cst_49 [2] : vector<8x8x8xf32> to vector<8x8xf32>
    %194 = vector.shape_cast %193 : vector<8x8xf32> to vector<8x8x1xf32>
    %195 = tpu.reciprocal %194 {approx = true} : vector<8x8x1xf32> -> vector<8x8x1xf32>
    %196 = vector.broadcast %195 : vector<8x8x1xf32> to vector<8x8x8xf32>
    %197 = arith.mulf %192, %196 : vector<8x8x8xf32>
    "tpu.trace_start"() <{level = 10 : i32, message = "nqk,nkd->nqd"}> : () -> ()
    %cst_50 = arith.constant dense<0.000000e+00> : vector<8x8x8xf32>
    %198 = tpu.matmul %197, %184, %cst_50 {dimension_numbers = #tpu.dot_dimension_numbers<[2], [1], [1], [2], [0, 0, 0, 1, 1, 2], [0], [0]>} : vector<8x8x8xf32>, vector<8x8x8xf32>, vector<8x8x8xf32> -> vector<8x8x8xf32>
    "tpu.trace_stop"() : () -> ()
    %199 = vector.extract_strided_slice %198 {offsets = [0, 0, 0], sizes = [2, 8, 8], strides = [1, 1, 1]} : vector<8x8x8xf32> to vector<2x8x8xf32>
    %200 = vector.shape_cast %199 : vector<2x8x8xf32> to vector<16x8xf32>
    %201 = vector.extract_strided_slice %198 {offsets = [2, 0, 0], sizes = [2, 8, 8], strides = [1, 1, 1]} : vector<8x8x8xf32> to vector<2x8x8xf32>
    %202 = vector.shape_cast %201 : vector<2x8x8xf32> to vector<16x8xf32>
    %203 = vector.extract_strided_slice %198 {offsets = [4, 0, 0], sizes = [2, 8, 8], strides = [1, 1, 1]} : vector<8x8x8xf32> to vector<2x8x8xf32>
    %204 = vector.shape_cast %203 : vector<2x8x8xf32> to vector<16x8xf32>
    %205 = vector.extract_strided_slice %198 {offsets = [6, 0, 0], sizes = [2, 8, 8], strides = [1, 1, 1]} : vector<8x8x8xf32> to vector<2x8x8xf32>
    %206 = vector.shape_cast %205 : vector<2x8x8xf32> to vector<16x8xf32>
    %207 = tpu.concatenate %200, %202, %204, %206 in 1 : vector<16x8xf32>, vector<16x8xf32>, vector<16x8xf32>, vector<16x8xf32> -> vector<16x32xf32>
    %cst_51 = arith.constant dense<0.000000e+00> : vector<16x32xf32>
    %208 = tpu.matmul %207, %154, %cst_51 {dimension_numbers = #tpu.dot_dimension_numbers<[1], [0], [0], [1], [0, 0, 1, 1], [], []>} : vector<16x32xf32>, vector<32x32xf32>, vector<16x32xf32> -> vector<16x32xf32>
    %209 = vector.broadcast %164 : vector<1x32xf32> to vector<16x32xf32>
    %210 = arith.addf %208, %209 : vector<16x32xf32>
    %211 = arith.addf %149, %210 : vector<16x32xf32>
    %cst_52 = arith.constant dense<0.000000e+00> : vector<16xf32>
    %212 = vector.multi_reduction <add>, %211, %cst_52 [1] : vector<16x32xf32> to vector<16xf32>
    %213 = vector.shape_cast %212 : vector<16xf32> to vector<16x1xf32>
    %cst_53 = arith.constant 3.200000e+01 : f32
    %214 = vector.broadcast %cst_53 : f32 to vector<16x1xf32>
    %215 = arith.divf %213, %214 : vector<16x1xf32>
    %216 = vector.broadcast %215 : vector<16x1xf32> to vector<16x32xf32>
    %217 = arith.subf %211, %216 : vector<16x32xf32>
    %218 = arith.mulf %217, %217 : vector<16x32xf32>
    %cst_54 = arith.constant dense<0.000000e+00> : vector<16xf32>
    %219 = vector.multi_reduction <add>, %218, %cst_54 [1] : vector<16x32xf32> to vector<16xf32>
    %220 = vector.shape_cast %219 : vector<16xf32> to vector<16x1xf32>
    %cst_55 = arith.constant 3.200000e+01 : f32
    %221 = vector.broadcast %cst_55 : f32 to vector<16x1xf32>
    %222 = arith.divf %220, %221 : vector<16x1xf32>
    %cst_56 = arith.constant 9.99999996E-13 : f32
    %223 = vector.broadcast %cst_56 : f32 to vector<16x1xf32>
    %224 = arith.addf %222, %223 : vector<16x1xf32>
    %225 = math.rsqrt %224 : vector<16x1xf32>
    %226 = vector.broadcast %225 : vector<16x1xf32> to vector<16x32xf32>
    %227 = arith.mulf %217, %226 : vector<16x32xf32>
    %228 = vector.broadcast %165 : vector<1x32xf32> to vector<16x32xf32>
    %229 = arith.mulf %227, %228 : vector<16x32xf32>
    %230 = vector.broadcast %166 : vector<1x32xf32> to vector<16x32xf32>
    %231 = arith.addf %229, %230 : vector<16x32xf32>
    %cst_57 = arith.constant dense<0.000000e+00> : vector<16x64xf32>
    %232 = tpu.matmul %231, %155, %cst_57 {dimension_numbers = #tpu.dot_dimension_numbers<[1], [0], [0], [1], [0, 0, 1, 1], [], []>} : vector<16x32xf32>, vector<32x64xf32>, vector<16x64xf32> -> vector<16x64xf32>
    %233 = vector.broadcast %160 : vector<1x64xf32> to vector<16x64xf32>
    %234 = arith.addf %232, %233 : vector<16x64xf32>
    %cst_58 = arith.constant 5.000000e-01 : f32
    %235 = vector.broadcast %cst_58 : f32 to vector<16x64xf32>
    %236 = arith.mulf %235, %234 : vector<16x64xf32>
    %cst_59 = arith.constant 4.471500e-02 : f32
    %237 = vector.broadcast %cst_59 : f32 to vector<16x64xf32>
    %238 = arith.mulf %237, %234 : vector<16x64xf32>
    %239 = arith.mulf %238, %234 : vector<16x64xf32>
    %240 = arith.mulf %239, %234 : vector<16x64xf32>
    %241 = arith.addf %234, %240 : vector<16x64xf32>
    %cst_60 = arith.constant 0.797884583 : f32
    %242 = vector.broadcast %cst_60 : f32 to vector<16x64xf32>
    %243 = arith.mulf %242, %241 : vector<16x64xf32>
    %244 = math.tanh %243 : vector<16x64xf32>
    %cst_61 = arith.constant 1.000000e+00 : f32
    %245 = vector.broadcast %cst_61 : f32 to vector<16x64xf32>
    %246 = arith.addf %245, %244 : vector<16x64xf32>
    %247 = arith.mulf %236, %246 : vector<16x64xf32>
    %248 = arith.index_cast %c1_i32 : i32 to index
    %c0_62 = arith.constant 0 : index
    %c0_63 = arith.constant 0 : index
    %249 = vector.load %arg6[%248, %c0_62, %c0_63] : memref<2x64x32xf32, #tpu.memory_space<vmem>>, vector<1x64x32xf32>
    %250 = vector.shape_cast %249 : vector<1x64x32xf32> to vector<64x32xf32>
    %cst_64 = arith.constant dense<0.000000e+00> : vector<16x32xf32>
    %251 = tpu.matmul %247, %250, %cst_64 {dimension_numbers = #tpu.dot_dimension_numbers<[1], [0], [0], [1], [0, 0, 1, 1], [], []>} : vector<16x64xf32>, vector<64x32xf32>, vector<16x32xf32> -> vector<16x32xf32>
    %252 = vector.broadcast %167 : vector<1x32xf32> to vector<16x32xf32>
    %253 = arith.addf %251, %252 : vector<16x32xf32>
    %254 = arith.addf %231, %253 : vector<16x32xf32>
    %cst_65 = arith.constant dense<0.000000e+00> : vector<16xf32>
    %255 = vector.multi_reduction <add>, %254, %cst_65 [1] : vector<16x32xf32> to vector<16xf32>
    %256 = vector.shape_cast %255 : vector<16xf32> to vector<16x1xf32>
    %cst_66 = arith.constant 3.200000e+01 : f32
    %257 = vector.broadcast %cst_66 : f32 to vector<16x1xf32>
    %258 = arith.divf %256, %257 : vector<16x1xf32>
    %259 = vector.broadcast %258 : vector<16x1xf32> to vector<16x32xf32>
    %260 = arith.subf %254, %259 : vector<16x32xf32>
    %261 = arith.mulf %260, %260 : vector<16x32xf32>
    %cst_67 = arith.constant dense<0.000000e+00> : vector<16xf32>
    %262 = vector.multi_reduction <add>, %261, %cst_67 [1] : vector<16x32xf32> to vector<16xf32>
    %263 = vector.shape_cast %262 : vector<16xf32> to vector<16x1xf32>
    %cst_68 = arith.constant 3.200000e+01 : f32
    %264 = vector.broadcast %cst_68 : f32 to vector<16x1xf32>
    %265 = arith.divf %263, %264 : vector<16x1xf32>
    %cst_69 = arith.constant 9.99999996E-13 : f32
    %266 = vector.broadcast %cst_69 : f32 to vector<16x1xf32>
    %267 = arith.addf %265, %266 : vector<16x1xf32>
    %268 = math.rsqrt %267 : vector<16x1xf32>
    %269 = vector.broadcast %268 : vector<16x1xf32> to vector<16x32xf32>
    %270 = arith.mulf %260, %269 : vector<16x32xf32>
    %271 = vector.broadcast %168 : vector<1x32xf32> to vector<16x32xf32>
    %272 = arith.mulf %270, %271 : vector<16x32xf32>
    %273 = vector.broadcast %169 : vector<1x32xf32> to vector<16x32xf32>
    %274 = arith.addf %272, %273 : vector<16x32xf32>
    %c2_i32 = arith.constant 2 : i32
    %c0_70 = arith.constant 0 : index
    %c0_71 = arith.constant 0 : index
    %275 = vector.load %arg3[%c0_70, %c0_71] : memref<1x39xf32, #tpu.memory_space<vmem>>, vector<1x39xf32>
    %276 = vector.extract_strided_slice %275 {offsets = [0, 0], sizes = [1, 32], strides = [1, 1]} : vector<1x39xf32> to vector<1x32xf32>
    %277 = vector.extract_strided_slice %275 {offsets = [0, 32], sizes = [1, 1], strides = [1, 1]} : vector<1x39xf32> to vector<1x1xf32>
    %278 = vector.extract_strided_slice %275 {offsets = [0, 33], sizes = [1, 6], strides = [1, 1]} : vector<1x39xf32> to vector<1x6xf32>
    "tpu.trace_start"() <{level = 10 : i32, message = "oh,sh->os"}> : () -> ()
    %cst_72 = arith.constant dense<0.000000e+00> : vector<1x16xf32>
    %279 = tpu.matmul %276, %274, %cst_72 {dimension_numbers = #tpu.dot_dimension_numbers<[1], [1], [0], [0], [0, 0, 1, 0], [], []>} : vector<1x32xf32>, vector<16x32xf32>, vector<1x16xf32> -> vector<1x16xf32>
    "tpu.trace_stop"() : () -> ()
    %c0_73 = arith.constant 0 : index
    %c0_74 = arith.constant 0 : index
    %280 = vector.load %arg2[%c0_73, %c0_74] : memref<16x6xf32, #tpu.memory_space<vmem>>, vector<16x6xf32>
    %cst_75 = arith.constant dense<0.000000e+00> : vector<1x6xf32>
    %281 = tpu.matmul %279, %280, %cst_75 {dimension_numbers = #tpu.dot_dimension_numbers<[1], [0], [0], [1], [0, 0, 1, 1], [], []>} : vector<1x16xf32>, vector<16x6xf32>, vector<1x6xf32> -> vector<1x6xf32>
    %282 = vector.broadcast %277 : vector<1x1xf32> to vector<1x6xf32>
    %283 = arith.addf %281, %282 : vector<1x6xf32>
    %284 = arith.negf %283 : vector<1x6xf32>
    %285 = math.exp %284 : vector<1x6xf32>
    %cst_76 = arith.constant 1.000000e+00 : f32
    %286 = vector.broadcast %cst_76 : f32 to vector<1x6xf32>
    %287 = arith.addf %286, %285 : vector<1x6xf32>
    %288 = arith.divf %286, %287 : vector<1x6xf32>
    %289 = arith.mulf %288, %278 : vector<1x6xf32>
    %c0_77 = arith.constant 0 : index
    %c0_78 = arith.constant 0 : index
    %290 = vector.load %arg9[%c0_77, %c0_78] : memref<1x6xf32, #tpu.memory_space<vmem>>, vector<1x6xf32>
    tpu.vector_store %arg9[%c0_77, %c0_78], %289 {strides = array<i32>} : memref<1x6xf32, #tpu.memory_space<vmem>>, vector<1x6xf32>,
    return
  }
}

</mosaic_0001>

<llo_original>
// kernel: tpu_custom_call.1
$region0: #{tpu_custom_call.1}
  #allocation0 [shape = 'u32[]', space=smem, size = 0x4, offset = 0x4, fixed_abs, tag = 'smem constant byte address 0x4 - core index']
  #allocation1 [shape = 'u32[72,128]{1,0:T(1,128)}', space=vmem, size = 0x9000, scoped, tag = 'internal scratch']
  %s0 = inlined_call_operand.vmem [shape: f32[16,32], index: 0, kind: input, shape index: {}]
  %s1 = inlined_call_operand.vmem [shape: f32[8,1,8], index: 1, kind: input, shape index: {}]
  %s2 = inlined_call_operand.vmem [shape: f32[16,6], index: 2, kind: input, shape index: {}]
  %s3 = inlined_call_operand.vmem [shape: f32[1,39], index: 3, kind: input, shape index: {}]
  %s4 = inlined_call_operand.vmem [shape: f32[2,32], index: 4, kind: input, shape index: {}]
  %s5 = inlined_call_operand.vmem [shape: f32[2,32,192], index: 5, kind: input, shape index: {}]
  %s6 = inlined_call_operand.vmem [shape: f32[2,64,32], index: 6, kind: input, shape index: {}]
  %s7 = inlined_call_operand.vmem [shape: f32[2,1,160], index: 7, kind: input, shape index: {}]
  %s8 = inlined_call_operand.vmem [shape: f32[2,6,32], index: 8, kind: input, shape index: {}]
  %s9 = inlined_call_operand.hbm [shape: f32[1,6], index: 9, kind: output, shape index: {}]
  %s10 = sld [smem:[#allocation0]]
  $region46: #{tpu_custom_call.1} parent=0
    _
  %s12 = ssub.s32 1, %s10
  %s13 = scalar_select 0, %s12, %s10
  $region1: #{tpu_custom_call.1} parent=0
    #allocation2 [shape = 'u8[512]{0}', space=vmem, size = 0x400, scoped, tag = 'output window, operand 0, single buffered']
    #allocation3 [shape = 's32[1]{0}', space=sflag, size = 0x4, scoped, tag = 'scoped memory for tpu_custom_call.1']
    %14 = vsyncpa [#allocation3], 0
    // Predicated region
    $region2: #{tpu_custom_call.1} parent=1 // pred_check
      _
    $region3: #{tpu_custom_call.1} parent=1 // pred_check_branch
      %16 = sbr.rel (0) target = $region5
    $region4: #{tpu_custom_call.1} parent=1 // pred_region
      _
    $region5: #{tpu_custom_call.1} parent=1 // pred_fallthru
      _
    // Predicated region
    $region6: #{tpu_custom_call.1} parent=1 // pred_check
      _
    $region7: #{tpu_custom_call.1} parent=1 // pred_check_branch
      %18 = sbr.rel (0) target = $region9
    $region8: #{tpu_custom_call.1} parent=1 // pred_region
      _
    $region9: #{tpu_custom_call.1} parent=1 // pred_fallthru
      _
    // Predicated region
    $region10: #{tpu_custom_call.1} parent=1 // pred_check
      _
    $region11: #{tpu_custom_call.1} parent=1 // pred_check_branch
      %20 = sbr.rel (0) target = $region13
    $region12: #{tpu_custom_call.1} parent=1 // pred_region
      _
    $region13: #{tpu_custom_call.1} parent=1 // pred_fallthru
      _
    // Predicated region
    $region14: #{tpu_custom_call.1} parent=1 // pred_check
      _
    $region15: #{tpu_custom_call.1} parent=1 // pred_check_branch
      %22 = sbr.rel (0) target = $region17
    $region16: #{tpu_custom_call.1} parent=1 // pred_region
      _
    $region17: #{tpu_custom_call.1} parent=1 // pred_fallthru
      _
    // Predicated region
    $region18: #{tpu_custom_call.1} parent=1 // pred_check
      _
    $region19: #{tpu_custom_call.1} parent=1 // pred_check_branch
      %24 = sbr.rel (0) target = $region21
    $region20: #{tpu_custom_call.1} parent=1 // pred_region
      _
    $region21: #{tpu_custom_call.1} parent=1 // pred_fallthru
      _
    // Predicated region
    $region22: #{tpu_custom_call.1} parent=1 // pred_check
      _
    $region23: #{tpu_custom_call.1} parent=1 // pred_check_branch
      %26 = sbr.rel (0) target = $region25
    $region24: #{tpu_custom_call.1} parent=1 // pred_region
      _
    $region25: #{tpu_custom_call.1} parent=1 // pred_fallthru
      _
    // Predicated region
    $region26: #{tpu_custom_call.1} parent=1 // pred_check
      _
    $region27: #{tpu_custom_call.1} parent=1 // pred_check_branch
      %28 = sbr.rel (0) target = $region29
    $region28: #{tpu_custom_call.1} parent=1 // pred_region
      _
    $region29: #{tpu_custom_call.1} parent=1 // pred_fallthru
      _
    // Predicated region
    $region30: #{tpu_custom_call.1} parent=1 // pred_check
      _
    $region31: #{tpu_custom_call.1} parent=1 // pred_check_branch
      %30 = sbr.rel (0) target = $region33
    $region32: #{tpu_custom_call.1} parent=1 // pred_region
      _
    $region33: #{tpu_custom_call.1} parent=1 // pred_fallthru
      _
    // Predicated region
    $region34: #{tpu_custom_call.1} parent=1 // pred_check
      _
    $region35: #{tpu_custom_call.1} parent=1 // pred_check_branch
      %32 = sbr.rel (0) target = $region37
    $region36: #{tpu_custom_call.1} parent=1 // pred_region
      _
    $region37: #{tpu_custom_call.1} parent=1 // pred_fallthru
      _
    %v33 = vld [vmem:[%s1] sm:$0x1]
    %v34 = vld [vmem:[%s1 + $0x1] sm:$0x1]
    %v35 = vld [vmem:[%s1 + $0x2] sm:$0x1]
    %v36 = vld [vmem:[%s1 + $0x3] sm:$0x1]
    %v37 = vld [vmem:[%s1 + $0x4] sm:$0x1]
    %v38 = vld [vmem:[%s1 + $0x5] sm:$0x1]
    %v39 = vld [vmem:[%s1 + $0x6] sm:$0x1]
    %v40 = vld [vmem:[%s1 + $0x7] sm:$0x1]
    %v41 = vld [vmem:[%s4] sm:$0x3]
    %v42 = vld [vmem:[%s0] sm:$0xff]
    %v43 = vld [vmem:[%s0 + $0x8] sm:$0xff]
    %vm44 = vcmask 261120
    %v45 = vsel %vm44, %v42, 0.0
    %46 = vadd.xlane.f32.xlu0 %v45
    %v47 = vpop.xlane.xlu0 %46
    %v48 = vsel %vm44, %v43, 0.0
    %49 = vadd.xlane.f32.xlu0 %v48
    %v50 = vpop.xlane.xlu0 %49
    %v51 = vrcp.pop 32.0
    %v52 = vmul.f32 32.0, %v51
    %v53 = vsub.f32 1.0, %v52
    %v54 = vmul.f32 %v51, %v53
    %v55 = vadd.f32 %v51, %v54
    %vm56 = vweird.f32 %v51
    %v57 = vsel %vm56, %v51, %v55
    %v58 = vmul.f32 %v47, %v57
    %v59 = vmul.f32 %v50, %v57
    %v60 = vsub.f32 %v42, %v58
    %v61 = vsub.f32 %v43, %v59
    %v62 = vmul.f32 %v60, %v60
    %v63 = vmul.f32 %v61, %v61
    %v64 = vsel %vm44, %v62, 0.0
    %65 = vadd.xlane.f32.xlu0 %v64
    %v66 = vpop.xlane.xlu0 %65
    %v67 = vsel %vm44, %v63, 0.0
    %68 = vadd.xlane.f32.xlu0 %v67
    %v69 = vpop.xlane.xlu0 %68
    %v70 = vmul.f32 %v66, %v57
    %v71 = vmul.f32 %v69, %v57
    %v72 = vadd.f32 %v70, 1e-12
    %v73 = vadd.f32 %v71, 1e-12
    %v74 = vrsqrt.pop %v72
    %v75 = vmul.f32 %v74, %v72
    %v76 = vmul.f32 %v75, %v74
    %v77 = vmul.f32 0.5, %v76
    %v78 = vsub.f32 1.5, %v77
    %v79 = vmul.f32 %v74, %v78
    %vm80 = vweird.f32 %v72
    %vm81 = vweird.f32 %v74
    %vm82 = vmor %vm80, %vm81
    %v83 = vsel %vm82, %v74, %v79
    %v84 = vrsqrt.pop %v73
    %v85 = vmul.f32 %v84, %v73
    %v86 = vmul.f32 %v85, %v84
    %v87 = vmul.f32 0.5, %v86
    %v88 = vsub.f32 1.5, %v87
    %v89 = vmul.f32 %v84, %v88
    %vm90 = vweird.f32 %v73
    %vm91 = vweird.f32 %v84
    %vm92 = vmor %vm90, %vm91
    %v93 = vsel %vm92, %v84, %v89
    %v94 = vmul.f32 %v60, %v83
    %v95 = vmul.f32 %v61, %v93
    %v96 = vperm.slane %v41, 0
    %v97 = vmul.f32 %v94, %v96
    %v98 = vmul.f32 %v95, %v96
    %v99 = vperm.slane %v41, 1
    %v100 = vadd.f32 %v97, %v99
    %v101 = vadd.f32 %v98, %v99
    %v102 = vld [vmem:[%s5] sm:$0xff]
    %v103 = vld [vmem:[%s5 + $0x8] sm:$0xff]
    %v104 = vld [vmem:[%s5 + $0x10] sm:$0xff]
    %v105 = vld [vmem:[%s5 + $0x18] sm:$0xff]
    %v106 = vld [vmem:[%s5 + $0x20] sm:$0xff]
    %v107 = vld [vmem:[%s5 + $0x28] sm:$0xff]
    %v108 = vld [vmem:[%s5 + $0x30] sm:$0xff]
    %v109 = vld [vmem:[%s5 + $0x38] sm:$0xff]
    %v110 = vld [vmem:[%s7] sm:$0x3]
    %v111 = vld [vmem:[%s8] sm:$0x3f]
    %v113 = vperm.slane %v110, 0
    %v116 = vsel %vm44, %v100, 0
    %v119 = vsel %vm44, %v101, 0
    %121 = vmatpush.msra.mxu0 0.0
    %122 = vmatpush.msra.mxu0 0.0
    %123 = vmatpush.msra.mxu0 0.0
    %124 = vmatpush.msra.mxu0 0.0
    %125 = vmatpush.msra.mxu0 0.0
    %126 = vmatpush.msra.mxu0 0.0
    %127 = vmatpush.msra.mxu0 0.0
    %128 = vmatpush.msra.mxu0 0.0
    %129 = vmatpush.msra.mxu0 0.0
    %130 = vmatpush.msra.mxu0 0.0
    %131 = vmatpush.msra.mxu0 0.0
    %132 = vmatpush.msra.mxu0 0.0
    %133 = vmatpush.msra.mxu0 %v108
    %134 = vmatpush.msra.mxu0 %v106
    %135 = vmatpush.msra.mxu0 %v104
    %136 = vmatpush.msra.mxu0 %v102
    %137 = vmatmul.f32.gmra.mxu0 %v116
    %v138 = vpop.f32.mrf.mxu0
    %v139 = vadd.f32 %v113, %v138
    %140 = vmatmul.f32.gmra.mxu0 %v119
    %v141 = vpop.f32.mrf.mxu0
    %v142 = vadd.f32 %v113, %v141
    %143 = vdwg.mxu0
    %146 = vrot.lane.b32.xlu0 %v139, 104
    %v147 = vpop.permute.xlu0 %146
    %148 = vrot.lane.b32.xlu0 %v142, 104
    %v149 = vpop.permute.xlu0 %148
    %150 = vrot.lane.b32.xlu0 %v139, 80
    %v151 = vpop.permute.xlu0 %150
    %152 = vrot.lane.b32.xlu0 %v142, 80
    %v153 = vpop.permute.xlu0 %152
    %154 = vrot.lane.b32.xlu0 %v139, 56
    %v155 = vpop.permute.xlu0 %154
    %156 = vrot.lane.b32.xlu0 %v142, 56
    %v157 = vpop.permute.xlu0 %156
    %v166 = vperm.slane %v33, 0
    %v167 = vperm.slane %v34, 0
    %v168 = vperm.slane %v35, 0
    %v169 = vperm.slane %v36, 0
    %v170 = vperm.slane %v37, 0
    %v171 = vperm.slane %v38, 0
    %v172 = vperm.slane %v39, 0
    %v173 = vperm.slane %v40, 0
    %182 = vrot.lane.b32.xlu0 %v139, 120
    %v183 = vpop.permute.xlu0 %182
    %vm184 = vcmask 64512
    %v185 = vsel %vm184, %v139, 0
    %v187 = vsel %vm184, %v183, 0
    %189 = vmatpush.xpose.msra.mxu0 0.0
    %190 = vmatpush.xpose.msra.mxu0 0.0
    %191 = vmatpush.xpose.msra.mxu0 0.0
    %192 = vmatpush.xpose.msra.mxu0 0.0
    %193 = vmatpush.xpose.msra.mxu0 0.0
    %194 = vmatpush.xpose.msra.mxu0 0.0
    %195 = vmatpush.xpose.msra.mxu0 0.0
    %196 = vmatpush.xpose.msra.mxu0 0.0
    %197 = vmatpush.xpose.msra.mxu0 0.0
    %198 = vmatpush.xpose.msra.mxu0 0.0
    %199 = vmatpush.xpose.msra.mxu0 0.0
    %200 = vmatpush.xpose.msra.mxu0 0.0
    %201 = vmatpush.xpose.msra.mxu0 0.0
    %202 = vmatpush.xpose.msra.mxu0 0.0
    %203 = vmatpush.xpose.msra.mxu0 0.0
    %204 = vmatpush.xpose.msra.mxu0 %v187
    %205 = vmatmul.f32.gmra.mxu0 %v185
    %v206 = vpop.f32.mrf.mxu0
    %v207 = vadd.f32 %v166, %v206
    %208 = vdwg.mxu0
    %209 = vrot.lane.b32.xlu0 %v142, 120
    %v210 = vpop.permute.xlu0 %209
    %v211 = vsel %vm184, %v142, 0
    %v213 = vsel %vm184, %v210, 0
    %215 = vmatpush.xpose.msra.mxu0 0.0
    %216 = vmatpush.xpose.msra.mxu0 0.0
    %217 = vmatpush.xpose.msra.mxu0 0.0
    %218 = vmatpush.xpose.msra.mxu0 0.0
    %219 = vmatpush.xpose.msra.mxu0 0.0
    %220 = vmatpush.xpose.msra.mxu0 0.0
    %221 = vmatpush.xpose.msra.mxu0 0.0
    %222 = vmatpush.xpose.msra.mxu0 0.0
    %223 = vmatpush.xpose.msra.mxu0 0.0
    %224 = vmatpush.xpose.msra.mxu0 0.0
    %225 = vmatpush.xpose.msra.mxu0 0.0
    %226 = vmatpush.xpose.msra.mxu0 0.0
    %227 = vmatpush.xpose.msra.mxu0 0.0
    %228 = vmatpush.xpose.msra.mxu0 0.0
    %229 = vmatpush.xpose.msra.mxu0 0.0
    %230 = vmatpush.xpose.msra.mxu0 %v213
    %231 = vmatmul.f32.gmra.mxu0 %v211
    %v232 = vpop.f32.mrf.mxu0
    %v233 = vadd.f32 %v167, %v232
    %234 = vdwg.mxu0
    %235 = vrot.lane.b32.xlu0 %v147, 120
    %v236 = vpop.permute.xlu0 %235
    %v237 = vsel %vm184, %v147, 0
    %v239 = vsel %vm184, %v236, 0
    %241 = vmatpush.xpose.msra.mxu0 0.0
    %242 = vmatpush.xpose.msra.mxu0 0.0
    %243 = vmatpush.xpose.msra.mxu0 0.0
    %244 = vmatpush.xpose.msra.mxu0 0.0
    %245 = vmatpush.xpose.msra.mxu0 0.0
    %246 = vmatpush.xpose.msra.mxu0 0.0
    %247 = vmatpush.xpose.msra.mxu0 0.0
    %248 = vmatpush.xpose.msra.mxu0 0.0
    %249 = vmatpush.xpose.msra.mxu0 0.0
    %250 = vmatpush.xpose.msra.mxu0 0.0
    %251 = vmatpush.xpose.msra.mxu0 0.0
    %252 = vmatpush.xpose.msra.mxu0 0.0
    %253 = vmatpush.xpose.msra.mxu0 0.0
    %254 = vmatpush.xpose.msra.mxu0 0.0
    %255 = vmatpush.xpose.msra.mxu0 0.0
    %256 = vmatpush.xpose.msra.mxu0 %v239
    %257 = vmatmul.f32.gmra.mxu0 %v237
    %v258 = vpop.f32.mrf.mxu0
    %v259 = vadd.f32 %v168, %v258
    %260 = vdwg.mxu0
    %261 = vrot.lane.b32.xlu0 %v149, 120
    %v262 = vpop.permute.xlu0 %261
    %v263 = vsel %vm184, %v149, 0
    %v265 = vsel %vm184, %v262, 0
    %267 = vmatpush.xpose.msra.mxu0 0.0
    %268 = vmatpush.xpose.msra.mxu0 0.0
    %269 = vmatpush.xpose.msra.mxu0 0.0
    %270 = vmatpush.xpose.msra.mxu0 0.0
    %271 = vmatpush.xpose.msra.mxu0 0.0
    %272 = vmatpush.xpose.msra.mxu0 0.0
    %273 = vmatpush.xpose.msra.mxu0 0.0
    %274 = vmatpush.xpose.msra.mxu0 0.0
    %275 = vmatpush.xpose.msra.mxu0 0.0
    %276 = vmatpush.xpose.msra.mxu0 0.0
    %277 = vmatpush.xpose.msra.mxu0 0.0
    %278 = vmatpush.xpose.msra.mxu0 0.0
    %279 = vmatpush.xpose.msra.mxu0 0.0
    %280 = vmatpush.xpose.msra.mxu0 0.0
    %281 = vmatpush.xpose.msra.mxu0 0.0
    %282 = vmatpush.xpose.msra.mxu0 %v265
    %283 = vmatmul.f32.gmra.mxu0 %v263
    %v284 = vpop.f32.mrf.mxu0
    %v285 = vadd.f32 %v169, %v284
    %286 = vdwg.mxu0
    %287 = vrot.lane.b32.xlu0 %v151, 120
    %v288 = vpop.permute.xlu0 %287
    %v289 = vsel %vm184, %v151, 0
    %v291 = vsel %vm184, %v288, 0
    %293 = vmatpush.xpose.msra.mxu0 0.0
    %294 = vmatpush.xpose.msra.mxu0 0.0
    %295 = vmatpush.xpose.msra.mxu0 0.0
    %296 = vmatpush.xpose.msra.mxu0 0.0
    %297 = vmatpush.xpose.msra.mxu0 0.0
    %298 = vmatpush.xpose.msra.mxu0 0.0
    %299 = vmatpush.xpose.msra.mxu0 0.0
    %300 = vmatpush.xpose.msra.mxu0 0.0
    %301 = vmatpush.xpose.msra.mxu0 0.0
    %302 = vmatpush.xpose.msra.mxu0 0.0
    %303 = vmatpush.xpose.msra.mxu0 0.0
    %304 = vmatpush.xpose.msra.mxu0 0.0
    %305 = vmatpush.xpose.msra.mxu0 0.0
    %306 = vmatpush.xpose.msra.mxu0 0.0
    %307 = vmatpush.xpose.msra.mxu0 0.0
    %308 = vmatpush.xpose.msra.mxu0 %v291
    %309 = vmatmul.f32.gmra.mxu0 %v289
    %v310 = vpop.f32.mrf.mxu0
    %v311 = vadd.f32 %v170, %v310
    %312 = vdwg.mxu0
    %313 = vrot.lane.b32.xlu0 %v153, 120
    %v314 = vpop.permute.xlu0 %313
    %v315 = vsel %vm184, %v153, 0
    %v317 = vsel %vm184, %v314, 0
    %319 = vmatpush.xpose.msra.mxu0 0.0
    %320 = vmatpush.xpose.msra.mxu0 0.0
    %321 = vmatpush.xpose.msra.mxu0 0.0
    %322 = vmatpush.xpose.msra.mxu0 0.0
    %323 = vmatpush.xpose.msra.mxu0 0.0
    %324 = vmatpush.xpose.msra.mxu0 0.0
    %325 = vmatpush.xpose.msra.mxu0 0.0
    %326 = vmatpush.xpose.msra.mxu0 0.0
    %327 = vmatpush.xpose.msra.mxu0 0.0
    %328 = vmatpush.xpose.msra.mxu0 0.0
    %329 = vmatpush.xpose.msra.mxu0 0.0
    %330 = vmatpush.xpose.msra.mxu0 0.0
    %331 = vmatpush.xpose.msra.mxu0 0.0
    %332 = vmatpush.xpose.msra.mxu0 0.0
    %333 = vmatpush.xpose.msra.mxu0 0.0
    %334 = vmatpush.xpose.msra.mxu0 %v317
    %335 = vmatmul.f32.gmra.mxu0 %v315
    %v336 = vpop.f32.mrf.mxu0
    %v337 = vadd.f32 %v171, %v336
    %338 = vdwg.mxu0
    %339 = vrot.lane.b32.xlu0 %v155, 120
    %v340 = vpop.permute.xlu0 %339
    %v341 = vsel %vm184, %v155, 0
    %v343 = vsel %vm184, %v340, 0
    %345 = vmatpush.xpose.msra.mxu0 0.0
    %346 = vmatpush.xpose.msra.mxu0 0.0
    %347 = vmatpush.xpose.msra.mxu0 0.0
    %348 = vmatpush.xpose.msra.mxu0 0.0
    %349 = vmatpush.xpose.msra.mxu0 0.0
    %350 = vmatpush.xpose.msra.mxu0 0.0
    %351 = vmatpush.xpose.msra.mxu0 0.0
    %352 = vmatpush.xpose.msra.mxu0 0.0
    %353 = vmatpush.xpose.msra.mxu0 0.0
    %354 = vmatpush.xpose.msra.mxu0 0.0
    %355 = vmatpush.xpose.msra.mxu0 0.0
    %356 = vmatpush.xpose.msra.mxu0 0.0
    %357 = vmatpush.xpose.msra.mxu0 0.0
    %358 = vmatpush.xpose.msra.mxu0 0.0
    %359 = vmatpush.xpose.msra.mxu0 0.0
    %360 = vmatpush.xpose.msra.mxu0 %v343
    %361 = vmatmul.f32.gmra.mxu0 %v341
    %v362 = vpop.f32.mrf.mxu0
    %v363 = vadd.f32 %v172, %v362
    %364 = vdwg.mxu0
    %365 = vrot.lane.b32.xlu0 %v157, 120
    %v366 = vpop.permute.xlu0 %365
    %v367 = vsel %vm184, %v157, 0
    %v369 = vsel %vm184, %v366, 0
    %371 = vmatpush.xpose.msra.mxu0 0.0
    %372 = vmatpush.xpose.msra.mxu0 0.0
    %373 = vmatpush.xpose.msra.mxu0 0.0
    %374 = vmatpush.xpose.msra.mxu0 0.0
    %375 = vmatpush.xpose.msra.mxu0 0.0
    %376 = vmatpush.xpose.msra.mxu0 0.0
    %377 = vmatpush.xpose.msra.mxu0 0.0
    %378 = vmatpush.xpose.msra.mxu0 0.0
    %379 = vmatpush.xpose.msra.mxu0 0.0
    %380 = vmatpush.xpose.msra.mxu0 0.0
    %381 = vmatpush.xpose.msra.mxu0 0.0
    %382 = vmatpush.xpose.msra.mxu0 0.0
    %383 = vmatpush.xpose.msra.mxu0 0.0
    %384 = vmatpush.xpose.msra.mxu0 0.0
    %385 = vmatpush.xpose.msra.mxu0 0.0
    %386 = vmatpush.xpose.msra.mxu0 %v369
    %387 = vmatmul.f32.gmra.mxu0 %v367
    %v388 = vpop.f32.mrf.mxu0
    %v389 = vadd.f32 %v173, %v388
    %390 = vdwg.mxu0
    %v391 = vsel %vm184, %v207, -inf
    %392 = vmax.xlane.f32.xlu0 %v391
    %v393 = vpop.xlane.xlu0 %392
    %v394 = vsel %vm184, %v233, -inf
    %395 = vmax.xlane.f32.xlu0 %v394
    %v396 = vpop.xlane.xlu0 %395
    %v397 = vsel %vm184, %v259, -inf
    %398 = vmax.xlane.f32.xlu0 %v397
    %v399 = vpop.xlane.xlu0 %398
    %v400 = vsel %vm184, %v285, -inf
    %401 = vmax.xlane.f32.xlu0 %v400
    %v402 = vpop.xlane.xlu0 %401
    %v403 = vsel %vm184, %v311, -inf
    %404 = vmax.xlane.f32.xlu0 %v403
    %v405 = vpop.xlane.xlu0 %404
    %v406 = vsel %vm184, %v337, -inf
    %407 = vmax.xlane.f32.xlu0 %v406
    %v408 = vpop.xlane.xlu0 %407
    %v409 = vsel %vm184, %v363, -inf
    %410 = vmax.xlane.f32.xlu0 %v409
    %v411 = vpop.xlane.xlu0 %410
    %v412 = vsel %vm184, %v389, -inf
    %413 = vmax.xlane.f32.xlu0 %v412
    %v414 = vpop.xlane.xlu0 %413
    %v415 = vsub.f32 %v207, %v393
    %v416 = vsub.f32 %v233, %v396
    %v417 = vsub.f32 %v259, %v399
    %v418 = vsub.f32 %v285, %v402
    %v419 = vsub.f32 %v311, %v405
    %v420 = vsub.f32 %v337, %v408
    %v421 = vsub.f32 %v363, %v411
    %v422 = vsub.f32 %v389, %v414
    %v423 = vmul.f32 %v415, 1.442695
    %v424 = vpow.pop %v423
    %v425 = vmul.f32 %v416, 1.442695
    %v426 = vpow.pop %v425
    %v427 = vmul.f32 %v417, 1.442695
    %v428 = vpow.pop %v427
    %v429 = vmul.f32 %v418, 1.442695
    %v430 = vpow.pop %v429
    %v431 = vmul.f32 %v419, 1.442695
    %v432 = vpow.pop %v431
    %v433 = vmul.f32 %v420, 1.442695
    %v434 = vpow.pop %v433
    %v435 = vmul.f32 %v421, 1.442695
    %v436 = vpow.pop %v435
    %v437 = vmul.f32 %v422, 1.442695
    %v438 = vpow.pop %v437
    %v439 = vsel %vm184, %v424, 0.0
    %440 = vadd.xlane.f32.xlu0 %v439
    %v441 = vpop.xlane.xlu0 %440
    %v442 = vsel %vm184, %v426, 0.0
    %443 = vadd.xlane.f32.xlu0 %v442
    %v444 = vpop.xlane.xlu0 %443
    %v445 = vsel %vm184, %v428, 0.0
    %446 = vadd.xlane.f32.xlu0 %v445
    %v447 = vpop.xlane.xlu0 %446
    %v448 = vsel %vm184, %v430, 0.0
    %449 = vadd.xlane.f32.xlu0 %v448
    %v450 = vpop.xlane.xlu0 %449
    %v451 = vsel %vm184, %v432, 0.0
    %452 = vadd.xlane.f32.xlu0 %v451
    %v453 = vpop.xlane.xlu0 %452
    %v454 = vsel %vm184, %v434, 0.0
    %455 = vadd.xlane.f32.xlu0 %v454
    %v456 = vpop.xlane.xlu0 %455
    %v457 = vsel %vm184, %v436, 0.0
    %458 = vadd.xlane.f32.xlu0 %v457
    %v459 = vpop.xlane.xlu0 %458
    %v460 = vsel %vm184, %v438, 0.0
    %461 = vadd.xlane.f32.xlu0 %v460
    %v462 = vpop.xlane.xlu0 %461
    %v463 = vrcp.pop %v441
    %v464 = vrcp.pop %v444
    %v465 = vrcp.pop %v447
    %v466 = vrcp.pop %v450
    %v467 = vrcp.pop %v453
    %v468 = vrcp.pop %v456
    %v469 = vrcp.pop %v459
    %v470 = vrcp.pop %v462
    %v471 = vmul.f32 %v424, %v463
    %v472 = vmul.f32 %v426, %v464
    %v473 = vmul.f32 %v428, %v465
    %v474 = vmul.f32 %v430, %v466
    %v475 = vmul.f32 %v432, %v467
    %v476 = vmul.f32 %v434, %v468
    %v477 = vmul.f32 %v436, %v469
    %v478 = vmul.f32 %v438, %v470
    %479 = vrot.lane.b32.xlu0 %v139, 112
    %v480 = vpop.permute.xlu0 %479
    %v483 = vsel %vm184, %v471, 0
    %485 = vmatpush.msra.mxu0 0.0
    %486 = vmatpush.msra.mxu0 0.0
    %487 = vmatpush.msra.mxu0 0.0
    %488 = vmatpush.msra.mxu0 0.0
    %489 = vmatpush.msra.mxu0 0.0
    %490 = vmatpush.msra.mxu0 0.0
    %491 = vmatpush.msra.mxu0 0.0
    %492 = vmatpush.msra.mxu0 0.0
    %493 = vmatpush.msra.mxu0 0.0
    %494 = vmatpush.msra.mxu0 0.0
    %495 = vmatpush.msra.mxu0 0.0
    %496 = vmatpush.msra.mxu0 0.0
    %497 = vmatpush.msra.mxu0 0.0
    %498 = vmatpush.msra.mxu0 0.0
    %499 = vmatpush.msra.mxu0 0.0
    %500 = vmatpush.msra.mxu0 %v480
    %501 = vmatmul.f32.gmra.mxu0 %v483
    %v502 = vpop.f32.mrf.mxu0
    %v503 = vadd.f32 0.0, %v502
    %504 = vdwg.mxu0
    %505 = vrot.lane.b32.xlu0 %v142, 112
    %v506 = vpop.permute.xlu0 %505
    %v509 = vsel %vm184, %v472, 0
    %511 = vmatpush.msra.mxu0 0.0
    %512 = vmatpush.msra.mxu0 0.0
    %513 = vmatpush.msra.mxu0 0.0
    %514 = vmatpush.msra.mxu0 0.0
    %515 = vmatpush.msra.mxu0 0.0
    %516 = vmatpush.msra.mxu0 0.0
    %517 = vmatpush.msra.mxu0 0.0
    %518 = vmatpush.msra.mxu0 0.0
    %519 = vmatpush.msra.mxu0 0.0
    %520 = vmatpush.msra.mxu0 0.0
    %521 = vmatpush.msra.mxu0 0.0
    %522 = vmatpush.msra.mxu0 0.0
    %523 = vmatpush.msra.mxu0 0.0
    %524 = vmatpush.msra.mxu0 0.0
    %525 = vmatpush.msra.mxu0 0.0
    %526 = vmatpush.msra.mxu0 %v506
    %527 = vmatmul.f32.gmra.mxu0 %v509
    %v528 = vpop.f32.mrf.mxu0
    %v529 = vadd.f32 0.0, %v528
    %530 = vdwg.mxu0
    %531 = vrot.lane.b32.xlu0 %v147, 112
    %v532 = vpop.permute.xlu0 %531
    %v535 = vsel %vm184, %v473, 0
    %537 = vmatpush.msra.mxu0 0.0
    %538 = vmatpush.msra.mxu0 0.0
    %539 = vmatpush.msra.mxu0 0.0
    %540 = vmatpush.msra.mxu0 0.0
    %541 = vmatpush.msra.mxu0 0.0
    %542 = vmatpush.msra.mxu0 0.0
    %543 = vmatpush.msra.mxu0 0.0
    %544 = vmatpush.msra.mxu0 0.0
    %545 = vmatpush.msra.mxu0 0.0
    %546 = vmatpush.msra.mxu0 0.0
    %547 = vmatpush.msra.mxu0 0.0
    %548 = vmatpush.msra.mxu0 0.0
    %549 = vmatpush.msra.mxu0 0.0
    %550 = vmatpush.msra.mxu0 0.0
    %551 = vmatpush.msra.mxu0 0.0
    %552 = vmatpush.msra.mxu0 %v532
    %553 = vmatmul.f32.gmra.mxu0 %v535
    %v554 = vpop.f32.mrf.mxu0
    %v555 = vadd.f32 0.0, %v554
    %556 = vdwg.mxu0
    %557 = vrot.lane.b32.xlu0 %v149, 112
    %v558 = vpop.permute.xlu0 %557
    %v561 = vsel %vm184, %v474, 0
    %563 = vmatpush.msra.mxu0 0.0
    %564 = vmatpush.msra.mxu0 0.0
    %565 = vmatpush.msra.mxu0 0.0
    %566 = vmatpush.msra.mxu0 0.0
    %567 = vmatpush.msra.mxu0 0.0
    %568 = vmatpush.msra.mxu0 0.0
    %569 = vmatpush.msra.mxu0 0.0
    %570 = vmatpush.msra.mxu0 0.0
    %571 = vmatpush.msra.mxu0 0.0
    %572 = vmatpush.msra.mxu0 0.0
    %573 = vmatpush.msra.mxu0 0.0
    %574 = vmatpush.msra.mxu0 0.0
    %575 = vmatpush.msra.mxu0 0.0
    %576 = vmatpush.msra.mxu0 0.0
    %577 = vmatpush.msra.mxu0 0.0
    %578 = vmatpush.msra.mxu0 %v558
    %579 = vmatmul.f32.gmra.mxu0 %v561
    %v580 = vpop.f32.mrf.mxu0
    %v581 = vadd.f32 0.0, %v580
    %582 = vdwg.mxu0
    %583 = vrot.lane.b32.xlu0 %v151, 112
    %v584 = vpop.permute.xlu0 %583
    %v587 = vsel %vm184, %v475, 0
    %589 = vmatpush.msra.mxu0 0.0
    %590 = vmatpush.msra.mxu0 0.0
    %591 = vmatpush.msra.mxu0 0.0
    %592 = vmatpush.msra.mxu0 0.0
    %593 = vmatpush.msra.mxu0 0.0
    %594 = vmatpush.msra.mxu0 0.0
    %595 = vmatpush.msra.mxu0 0.0
    %596 = vmatpush.msra.mxu0 0.0
    %597 = vmatpush.msra.mxu0 0.0
    %598 = vmatpush.msra.mxu0 0.0
    %599 = vmatpush.msra.mxu0 0.0
    %600 = vmatpush.msra.mxu0 0.0
    %601 = vmatpush.msra.mxu0 0.0
    %602 = vmatpush.msra.mxu0 0.0
    %603 = vmatpush.msra.mxu0 0.0
    %604 = vmatpush.msra.mxu0 %v584
    %605 = vmatmul.f32.gmra.mxu0 %v587
    %v606 = vpop.f32.mrf.mxu0
    %v607 = vadd.f32 0.0, %v606
    %608 = vdwg.mxu0
    %609 = vrot.lane.b32.xlu0 %v153, 112
    %v610 = vpop.permute.xlu0 %609
    %v613 = vsel %vm184, %v476, 0
    %615 = vmatpush.msra.mxu0 0.0
    %616 = vmatpush.msra.mxu0 0.0
    %617 = vmatpush.msra.mxu0 0.0
    %618 = vmatpush.msra.mxu0 0.0
    %619 = vmatpush.msra.mxu0 0.0
    %620 = vmatpush.msra.mxu0 0.0
    %621 = vmatpush.msra.mxu0 0.0
    %622 = vmatpush.msra.mxu0 0.0
    %623 = vmatpush.msra.mxu0 0.0
    %624 = vmatpush.msra.mxu0 0.0
    %625 = vmatpush.msra.mxu0 0.0
    %626 = vmatpush.msra.mxu0 0.0
    %627 = vmatpush.msra.mxu0 0.0
    %628 = vmatpush.msra.mxu0 0.0
    %629 = vmatpush.msra.mxu0 0.0
    %630 = vmatpush.msra.mxu0 %v610
    %631 = vmatmul.f32.gmra.mxu0 %v613
    %v632 = vpop.f32.mrf.mxu0
    %v633 = vadd.f32 0.0, %v632
    %634 = vdwg.mxu0
    %635 = vrot.lane.b32.xlu0 %v155, 112
    %v636 = vpop.permute.xlu0 %635
    %v639 = vsel %vm184, %v477, 0
    %641 = vmatpush.msra.mxu0 0.0
    %642 = vmatpush.msra.mxu0 0.0
    %643 = vmatpush.msra.mxu0 0.0
    %644 = vmatpush.msra.mxu0 0.0
    %645 = vmatpush.msra.mxu0 0.0
    %646 = vmatpush.msra.mxu0 0.0
    %647 = vmatpush.msra.mxu0 0.0
    %648 = vmatpush.msra.mxu0 0.0
    %649 = vmatpush.msra.mxu0 0.0
    %650 = vmatpush.msra.mxu0 0.0
    %651 = vmatpush.msra.mxu0 0.0
    %652 = vmatpush.msra.mxu0 0.0
    %653 = vmatpush.msra.mxu0 0.0
    %654 = vmatpush.msra.mxu0 0.0
    %655 = vmatpush.msra.mxu0 0.0
    %656 = vmatpush.msra.mxu0 %v636
    %657 = vmatmul.f32.gmra.mxu0 %v639
    %v658 = vpop.f32.mrf.mxu0
    %v659 = vadd.f32 0.0, %v658
    %660 = vdwg.mxu0
    %661 = vrot.lane.b32.xlu0 %v157, 112
    %v662 = vpop.permute.xlu0 %661
    %v665 = vsel %vm184, %v478, 0
    %667 = vmatpush.msra.mxu0 0.0
    %668 = vmatpush.msra.mxu0 0.0
    %669 = vmatpush.msra.mxu0 0.0
    %670 = vmatpush.msra.mxu0 0.0
    %671 = vmatpush.msra.mxu0 0.0
    %672 = vmatpush.msra.mxu0 0.0
    %673 = vmatpush.msra.mxu0 0.0
    %674 = vmatpush.msra.mxu0 0.0
    %675 = vmatpush.msra.mxu0 0.0
    %676 = vmatpush.msra.mxu0 0.0
    %677 = vmatpush.msra.mxu0 0.0
    %678 = vmatpush.msra.mxu0 0.0
    %679 = vmatpush.msra.mxu0 0.0
    %680 = vmatpush.msra.mxu0 0.0
    %681 = vmatpush.msra.mxu0 0.0
    %682 = vmatpush.msra.mxu0 %v662
    %683 = vmatmul.f32.gmra.mxu0 %v665
    %v684 = vpop.f32.mrf.mxu0
    %v685 = vadd.f32 0.0, %v684
    %686 = vdwg.mxu0
    %689 = vrot.lane.b32.xlu0 %v555, 8
    %v690 = vpop.permute.xlu0 %689
    %691 = vrot.lane.b32.xlu0 %v581, 8
    %v692 = vpop.permute.xlu0 %691
    %697 = vrot.lane.b32.xlu0 %v607, 16
    %v698 = vpop.permute.xlu0 %697
    %699 = vrot.lane.b32.xlu0 %v633, 16
    %v700 = vpop.permute.xlu0 %699
    %705 = vrot.lane.b32.xlu0 %v659, 24
    %v706 = vpop.permute.xlu0 %705
    %707 = vrot.lane.b32.xlu0 %v685, 24
    %v708 = vpop.permute.xlu0 %707
    %v711 = vsel %vm184, %v503, %v690
    %v712 = vsel %vm184, %v529, %v692
    %vm713 = vcmask 130048
    %v714 = vsel %vm713, %v711, %v698
    %v715 = vsel %vm713, %v712, %v700
    %vm716 = vcmask 195584
    %v717 = vsel %vm716, %v714, %v706
    %v718 = vsel %vm716, %v715, %v708
    %v719 = vperm.slane %v111, 0
    %724 = vrot.lane.b32.xlu0 %v102, 32
    %v725 = vpop.permute.xlu0 %724
    %726 = vrot.lane.b32.xlu0 %v104, 32
    %v727 = vpop.permute.xlu0 %726
    %728 = vrot.lane.b32.xlu0 %v106, 32
    %v729 = vpop.permute.xlu0 %728
    %730 = vrot.lane.b32.xlu0 %v108, 32
    %v731 = vpop.permute.xlu0 %730
    %v737 = vsel %vm44, %v717, 0
    %v740 = vsel %vm44, %v718, 0
    %742 = vmatpush.msra.mxu0 0.0
    %743 = vmatpush.msra.mxu0 0.0
    %744 = vmatpush.msra.mxu0 0.0
    %745 = vmatpush.msra.mxu0 0.0
    %746 = vmatpush.msra.mxu0 0.0
    %747 = vmatpush.msra.mxu0 0.0
    %748 = vmatpush.msra.mxu0 0.0
    %749 = vmatpush.msra.mxu0 0.0
    %750 = vmatpush.msra.mxu0 0.0
    %751 = vmatpush.msra.mxu0 0.0
    %752 = vmatpush.msra.mxu0 0.0
    %753 = vmatpush.msra.mxu0 0.0
    %754 = vmatpush.msra.mxu0 %v731
    %755 = vmatpush.msra.mxu0 %v729
    %756 = vmatpush.msra.mxu0 %v727
    %757 = vmatpush.msra.mxu0 %v725
    %758 = vmatmul.f32.gmra.mxu0 %v737
    %v759 = vpop.f32.mrf.mxu0
    %v760 = vadd.f32 %v719, %v759
    %761 = vmatmul.f32.gmra.mxu0 %v740
    %v762 = vpop.f32.mrf.mxu0
    %v763 = vadd.f32 %v719, %v762
    %764 = vdwg.mxu0
    %v765 = vadd.f32 %v100, %v760
    %v766 = vadd.f32 %v101, %v763
    %v767 = vsel %vm44, %v765, 0.0
    %768 = vadd.xlane.f32.xlu0 %v767
    %v769 = vpop.xlane.xlu0 %768
    %v770 = vsel %vm44, %v766, 0.0
    %771 = vadd.xlane.f32.xlu0 %v770
    %v772 = vpop.xlane.xlu0 %771
    %v773 = vmul.f32 %v769, %v57
    %v774 = vmul.f32 %v772, %v57
    %v775 = vsub.f32 %v765, %v773
    %v776 = vsub.f32 %v766, %v774
    %v777 = vmul.f32 %v775, %v775
    %v778 = vmul.f32 %v776, %v776
    %v779 = vsel %vm44, %v777, 0.0
    %780 = vadd.xlane.f32.xlu0 %v779
    %v781 = vpop.xlane.xlu0 %780
    %v782 = vsel %vm44, %v778, 0.0
    %783 = vadd.xlane.f32.xlu0 %v782
    %v784 = vpop.xlane.xlu0 %783
    %v785 = vmul.f32 %v781, %v57
    %v786 = vmul.f32 %v784, %v57
    %v787 = vadd.f32 %v785, 1e-12
    %v788 = vadd.f32 %v786, 1e-12
    %v789 = vrsqrt.pop %v787
    %v790 = vmul.f32 %v789, %v787
    %v791 = vmul.f32 %v790, %v789
    %v792 = vmul.f32 0.5, %v791
    %v793 = vsub.f32 1.5, %v792
    %v794 = vmul.f32 %v789, %v793
    %vm795 = vweird.f32 %v787
    %vm796 = vweird.f32 %v789
    %vm797 = vmor %vm795, %vm796
    %v798 = vsel %vm797, %v789, %v794
    %v799 = vrsqrt.pop %v788
    %v800 = vmul.f32 %v799, %v788
    %v801 = vmul.f32 %v800, %v799
    %v802 = vmul.f32 0.5, %v801
    %v803 = vsub.f32 1.5, %v802
    %v804 = vmul.f32 %v799, %v803
    %vm805 = vweird.f32 %v788
    %vm806 = vweird.f32 %v799
    %vm807 = vmor %vm805, %vm806
    %v808 = vsel %vm807, %v799, %v804
    %v809 = vmul.f32 %v775, %v798
    %v810 = vmul.f32 %v776, %v808
    %v811 = vperm.slane %v111, 1
    %v812 = vmul.f32 %v809, %v811
    %v813 = vmul.f32 %v810, %v811
    %v814 = vperm.slane %v111, 2
    %v815 = vadd.f32 %v812, %v814
    %v816 = vadd.f32 %v813, %v814
    %v817 = vperm.slane %v110, 1
    %818 = vrot.lane.b32.xlu0 %v113, 32
    %v819 = vpop.permute.xlu0 %818
    %820 = vrot.lane.b32.xlu0 %v817, 32
    %v821 = vpop.permute.xlu0 %820
    %v822 = vsel %vm44, %v819, %v821
    %v825 = vsel %vm44, %v815, 0
    %v828 = vsel %vm44, %v816, 0
    %830 = vmatpush.msra.mxu0 0.0
    %831 = vmatpush.msra.mxu0 0.0
    %832 = vmatpush.msra.mxu0 0.0
    %833 = vmatpush.msra.mxu0 0.0
    %834 = vmatpush.msra.mxu0 0.0
    %835 = vmatpush.msra.mxu0 0.0
    %836 = vmatpush.msra.mxu0 0.0
    %837 = vmatpush.msra.mxu0 0.0
    %838 = vmatpush.msra.mxu0 0.0
    %839 = vmatpush.msra.mxu0 0.0
    %840 = vmatpush.msra.mxu0 0.0
    %841 = vmatpush.msra.mxu0 0.0
    %842 = vmatpush.msra.mxu0 %v109
    %843 = vmatpush.msra.mxu0 %v107
    %844 = vmatpush.msra.mxu0 %v105
    %845 = vmatpush.msra.mxu0 %v103
    %846 = vmatmul.f32.gmra.mxu0 %v825
    %v847 = vpop.f32.mrf.mxu0
    %v848 = vadd.f32 %v822, %v847
    %849 = vmatmul.f32.gmra.mxu0 %v828
    %v850 = vpop.f32.mrf.mxu0
    %v851 = vadd.f32 %v822, %v850
    %852 = vdwg.mxu0
    %v853 = vmul.f32 %v848, 0.5
    %v854 = vmul.f32 %v851, 0.5
    %v855 = vmul.f32 %v848, 0.044715
    %v856 = vmul.f32 %v851, 0.044715
    %v857 = vmul.f32 %v855, %v848
    %v858 = vmul.f32 %v856, %v851
    %v859 = vmul.f32 %v857, %v848
    %v860 = vmul.f32 %v858, %v851
    %v861 = vadd.f32 %v848, %v859
    %v862 = vadd.f32 %v851, %v860
    %v863 = vmul.f32 %v861, 0.7978846
    %v864 = vmul.f32 %v862, 0.7978846
    %v865 = vtanh.pop %v863
    %v866 = vtanh.pop %v864
    %v867 = vadd.f32 %v865, 1.0
    %v868 = vadd.f32 %v866, 1.0
    %v869 = vmul.f32 %v853, %v867
    %v870 = vmul.f32 %v854, %v868
    %v871 = vld [vmem:[%s6] sm:$0xff]
    %v872 = vld [vmem:[%s6 + $0x8] sm:$0xff]
    %v873 = vld [vmem:[%s6 + $0x10] sm:$0xff]
    %v874 = vld [vmem:[%s6 + $0x18] sm:$0xff]
    %v875 = vld [vmem:[%s6 + $0x20] sm:$0xff]
    %v876 = vld [vmem:[%s6 + $0x28] sm:$0xff]
    %v877 = vld [vmem:[%s6 + $0x30] sm:$0xff]
    %v878 = vld [vmem:[%s6 + $0x38] sm:$0xff]
    %v879 = vperm.slane %v111, 3
    %vm880 = vcmask 523264
    %v882 = vsel %vm880, %v869, 0
    %v885 = vsel %vm880, %v870, 0
    %887 = vmatpush.msra.mxu0 0.0
    %888 = vmatpush.msra.mxu0 0.0
    %889 = vmatpush.msra.mxu0 0.0
    %890 = vmatpush.msra.mxu0 0.0
    %891 = vmatpush.msra.mxu0 0.0
    %892 = vmatpush.msra.mxu0 0.0
    %893 = vmatpush.msra.mxu0 0.0
    %894 = vmatpush.msra.mxu0 0.0
    %895 = vmatpush.msra.mxu0 %v878
    %896 = vmatpush.msra.mxu0 %v877
    %897 = vmatpush.msra.mxu0 %v876
    %898 = vmatpush.msra.mxu0 %v875
    %899 = vmatpush.msra.mxu0 %v874
    %900 = vmatpush.msra.mxu0 %v873
    %901 = vmatpush.msra.mxu0 %v872
    %902 = vmatpush.msra.mxu0 %v871
    %903 = vmatmul.f32.gmra.mxu0 %v882
    %v904 = vpop.f32.mrf.mxu0
    %v905 = vadd.f32 %v879, %v904
    %906 = vmatmul.f32.gmra.mxu0 %v885
    %v907 = vpop.f32.mrf.mxu0
    %v908 = vadd.f32 %v879, %v907
    %909 = vdwg.mxu0
    %v910 = vadd.f32 %v815, %v905
    %v911 = vadd.f32 %v816, %v908
    %v912 = vsel %vm44, %v910, 0.0
    %913 = vadd.xlane.f32.xlu0 %v912
    %v914 = vpop.xlane.xlu0 %913
    %v915 = vsel %vm44, %v911, 0.0
    %916 = vadd.xlane.f32.xlu0 %v915
    %v917 = vpop.xlane.xlu0 %916
    %v918 = vmul.f32 %v914, %v57
    %v919 = vmul.f32 %v917, %v57
    %v920 = vsub.f32 %v910, %v918
    %v921 = vsub.f32 %v911, %v919
    %v922 = vmul.f32 %v920, %v920
    %v923 = vmul.f32 %v921, %v921
    %v924 = vsel %vm44, %v922, 0.0
    %925 = vadd.xlane.f32.xlu0 %v924
    %v926 = vpop.xlane.xlu0 %925
    %v927 = vsel %vm44, %v923, 0.0
    %928 = vadd.xlane.f32.xlu0 %v927
    %v929 = vpop.xlane.xlu0 %928
    %v930 = vmul.f32 %v926, %v57
    %v931 = vmul.f32 %v929, %v57
    %v932 = vadd.f32 %v930, 1e-12
    %v933 = vadd.f32 %v931, 1e-12
    %v934 = vrsqrt.pop %v932
    %v935 = vmul.f32 %v934, %v932
    %v936 = vmul.f32 %v935, %v934
    %v937 = vmul.f32 0.5, %v936
    %v938 = vsub.f32 1.5, %v937
    %v939 = vmul.f32 %v934, %v938
    %vm940 = vweird.f32 %v932
    %vm941 = vweird.f32 %v934
    %vm942 = vmor %vm940, %vm941
    %v943 = vsel %vm942, %v934, %v939
    %v944 = vrsqrt.pop %v933
    %v945 = vmul.f32 %v944, %v933
    %v946 = vmul.f32 %v945, %v944
    %v947 = vmul.f32 0.5, %v946
    %v948 = vsub.f32 1.5, %v947
    %v949 = vmul.f32 %v944, %v948
    %vm950 = vweird.f32 %v933
    %vm951 = vweird.f32 %v944
    %vm952 = vmor %vm950, %vm951
    %v953 = vsel %vm952, %v944, %v949
    %v954 = vmul.f32 %v920, %v943
    %v955 = vmul.f32 %v921, %v953
    %v956 = vperm.slane %v111, 4
    %v957 = vmul.f32 %v954, %v956
    %v958 = vmul.f32 %v955, %v956
    %v959 = vperm.slane %v111, 5
    %v960 = vadd.f32 %v957, %v959
    %v961 = vadd.f32 %v958, %v959
    %s962 = scalar_lea.vmem %s5, 64
    %v963 = vld [vmem:[%s962] sm:$0xff]
    %v964 = vld [vmem:[%s962 + $0x8] sm:$0xff]
    %v965 = vld [vmem:[%s962 + $0x10] sm:$0xff]
    %v966 = vld [vmem:[%s962 + $0x18] sm:$0xff]
    %v967 = vld [vmem:[%s962 + $0x20] sm:$0xff]
    %v968 = vld [vmem:[%s962 + $0x28] sm:$0xff]
    %v969 = vld [vmem:[%s962 + $0x30] sm:$0xff]
    %v970 = vld [vmem:[%s962 + $0x38] sm:$0xff]
    %s971 = scalar_lea.vmem %s7, 2
    %v972 = vld [vmem:[%s971] sm:$0x3]
    %s973 = scalar_lea.vmem %s8, 8
    %v974 = vld [vmem:[%s973] sm:$0x3f]
    %v976 = vperm.slane %v972, 0
    %v979 = vsel %vm44, %v960, 0
    %v982 = vsel %vm44, %v961, 0
    %984 = vmatpush.msra.mxu0 0.0
    %985 = vmatpush.msra.mxu0 0.0
    %986 = vmatpush.msra.mxu0 0.0
    %987 = vmatpush.msra.mxu0 0.0
    %988 = vmatpush.msra.mxu0 0.0
    %989 = vmatpush.msra.mxu0 0.0
    %990 = vmatpush.msra.mxu0 0.0
    %991 = vmatpush.msra.mxu0 0.0
    %992 = vmatpush.msra.mxu0 0.0
    %993 = vmatpush.msra.mxu0 0.0
    %994 = vmatpush.msra.mxu0 0.0
    %995 = vmatpush.msra.mxu0 0.0
    %996 = vmatpush.msra.mxu0 %v969
    %997 = vmatpush.msra.mxu0 %v967
    %998 = vmatpush.msra.mxu0 %v965
    %999 = vmatpush.msra.mxu0 %v963
    %1000 = vmatmul.f32.gmra.mxu0 %v979
    %v1001 = vpop.f32.mrf.mxu0
    %v1002 = vadd.f32 %v976, %v1001
    %1003 = vmatmul.f32.gmra.mxu0 %v982
    %v1004 = vpop.f32.mrf.mxu0
    %v1005 = vadd.f32 %v976, %v1004
    %1006 = vdwg.mxu0
    %1009 = vrot.lane.b32.xlu0 %v1002, 104
    %v1010 = vpop.permute.xlu0 %1009
    %1011 = vrot.lane.b32.xlu0 %v1005, 104
    %v1012 = vpop.permute.xlu0 %1011
    %1013 = vrot.lane.b32.xlu0 %v1002, 80
    %v1014 = vpop.permute.xlu0 %1013
    %1015 = vrot.lane.b32.xlu0 %v1005, 80
    %v1016 = vpop.permute.xlu0 %1015
    %1017 = vrot.lane.b32.xlu0 %v1002, 56
    %v1018 = vpop.permute.xlu0 %1017
    %1019 = vrot.lane.b32.xlu0 %v1005, 56
    %v1020 = vpop.permute.xlu0 %1019
    %1021 = vrot.lane.b32.xlu0 %v1002, 120
    %v1022 = vpop.permute.xlu0 %1021
    %v1023 = vsel %vm184, %v1002, 0
    %v1025 = vsel %vm184, %v1022, 0
    %1027 = vmatpush.xpose.msra.mxu0 0.0
    %1028 = vmatpush.xpose.msra.mxu0 0.0
    %1029 = vmatpush.xpose.msra.mxu0 0.0
    %1030 = vmatpush.xpose.msra.mxu0 0.0
    %1031 = vmatpush.xpose.msra.mxu0 0.0
    %1032 = vmatpush.xpose.msra.mxu0 0.0
    %1033 = vmatpush.xpose.msra.mxu0 0.0
    %1034 = vmatpush.xpose.msra.mxu0 0.0
    %1035 = vmatpush.xpose.msra.mxu0 0.0
    %1036 = vmatpush.xpose.msra.mxu0 0.0
    %1037 = vmatpush.xpose.msra.mxu0 0.0
    %1038 = vmatpush.xpose.msra.mxu0 0.0
    %1039 = vmatpush.xpose.msra.mxu0 0.0
    %1040 = vmatpush.xpose.msra.mxu0 0.0
    %1041 = vmatpush.xpose.msra.mxu0 0.0
    %1042 = vmatpush.xpose.msra.mxu0 %v1025
    %1043 = vmatmul.f32.gmra.mxu0 %v1023
    %v1044 = vpop.f32.mrf.mxu0
    %v1045 = vadd.f32 %v166, %v1044
    %1046 = vdwg.mxu0
    %1047 = vrot.lane.b32.xlu0 %v1005, 120
    %v1048 = vpop.permute.xlu0 %1047
    %v1049 = vsel %vm184, %v1005, 0
    %v1051 = vsel %vm184, %v1048, 0
    %1053 = vmatpush.xpose.msra.mxu0 0.0
    %1054 = vmatpush.xpose.msra.mxu0 0.0
    %1055 = vmatpush.xpose.msra.mxu0 0.0
    %1056 = vmatpush.xpose.msra.mxu0 0.0
    %1057 = vmatpush.xpose.msra.mxu0 0.0
    %1058 = vmatpush.xpose.msra.mxu0 0.0
    %1059 = vmatpush.xpose.msra.mxu0 0.0
    %1060 = vmatpush.xpose.msra.mxu0 0.0
    %1061 = vmatpush.xpose.msra.mxu0 0.0
    %1062 = vmatpush.xpose.msra.mxu0 0.0
    %1063 = vmatpush.xpose.msra.mxu0 0.0
    %1064 = vmatpush.xpose.msra.mxu0 0.0
    %1065 = vmatpush.xpose.msra.mxu0 0.0
    %1066 = vmatpush.xpose.msra.mxu0 0.0
    %1067 = vmatpush.xpose.msra.mxu0 0.0
    %1068 = vmatpush.xpose.msra.mxu0 %v1051
    %1069 = vmatmul.f32.gmra.mxu0 %v1049
    %v1070 = vpop.f32.mrf.mxu0
    %v1071 = vadd.f32 %v167, %v1070
    %1072 = vdwg.mxu0
    %1073 = vrot.lane.b32.xlu0 %v1010, 120
    %v1074 = vpop.permute.xlu0 %1073
    %v1075 = vsel %vm184, %v1010, 0
    %v1077 = vsel %vm184, %v1074, 0
    %1079 = vmatpush.xpose.msra.mxu0 0.0
    %1080 = vmatpush.xpose.msra.mxu0 0.0
    %1081 = vmatpush.xpose.msra.mxu0 0.0
    %1082 = vmatpush.xpose.msra.mxu0 0.0
    %1083 = vmatpush.xpose.msra.mxu0 0.0
    %1084 = vmatpush.xpose.msra.mxu0 0.0
    %1085 = vmatpush.xpose.msra.mxu0 0.0
    %1086 = vmatpush.xpose.msra.mxu0 0.0
    %1087 = vmatpush.xpose.msra.mxu0 0.0
    %1088 = vmatpush.xpose.msra.mxu0 0.0
    %1089 = vmatpush.xpose.msra.mxu0 0.0
    %1090 = vmatpush.xpose.msra.mxu0 0.0
    %1091 = vmatpush.xpose.msra.mxu0 0.0
    %1092 = vmatpush.xpose.msra.mxu0 0.0
    %1093 = vmatpush.xpose.msra.mxu0 0.0
    %1094 = vmatpush.xpose.msra.mxu0 %v1077
    %1095 = vmatmul.f32.gmra.mxu0 %v1075
    %v1096 = vpop.f32.mrf.mxu0
    %v1097 = vadd.f32 %v168, %v1096
    %1098 = vdwg.mxu0
    %1099 = vrot.lane.b32.xlu0 %v1012, 120
    %v1100 = vpop.permute.xlu0 %1099
    %v1101 = vsel %vm184, %v1012, 0
    %v1103 = vsel %vm184, %v1100, 0
    %1105 = vmatpush.xpose.msra.mxu0 0.0
    %1106 = vmatpush.xpose.msra.mxu0 0.0
    %1107 = vmatpush.xpose.msra.mxu0 0.0
    %1108 = vmatpush.xpose.msra.mxu0 0.0
    %1109 = vmatpush.xpose.msra.mxu0 0.0
    %1110 = vmatpush.xpose.msra.mxu0 0.0
    %1111 = vmatpush.xpose.msra.mxu0 0.0
    %1112 = vmatpush.xpose.msra.mxu0 0.0
    %1113 = vmatpush.xpose.msra.mxu0 0.0
    %1114 = vmatpush.xpose.msra.mxu0 0.0
    %1115 = vmatpush.xpose.msra.mxu0 0.0
    %1116 = vmatpush.xpose.msra.mxu0 0.0
    %1117 = vmatpush.xpose.msra.mxu0 0.0
    %1118 = vmatpush.xpose.msra.mxu0 0.0
    %1119 = vmatpush.xpose.msra.mxu0 0.0
    %1120 = vmatpush.xpose.msra.mxu0 %v1103
    %1121 = vmatmul.f32.gmra.mxu0 %v1101
    %v1122 = vpop.f32.mrf.mxu0
    %v1123 = vadd.f32 %v169, %v1122
    %1124 = vdwg.mxu0
    %1125 = vrot.lane.b32.xlu0 %v1014, 120
    %v1126 = vpop.permute.xlu0 %1125
    %v1127 = vsel %vm184, %v1014, 0
    %v1129 = vsel %vm184, %v1126, 0
    %1131 = vmatpush.xpose.msra.mxu0 0.0
    %1132 = vmatpush.xpose.msra.mxu0 0.0
    %1133 = vmatpush.xpose.msra.mxu0 0.0
    %1134 = vmatpush.xpose.msra.mxu0 0.0
    %1135 = vmatpush.xpose.msra.mxu0 0.0
    %1136 = vmatpush.xpose.msra.mxu0 0.0
    %1137 = vmatpush.xpose.msra.mxu0 0.0
    %1138 = vmatpush.xpose.msra.mxu0 0.0
    %1139 = vmatpush.xpose.msra.mxu0 0.0
    %1140 = vmatpush.xpose.msra.mxu0 0.0
    %1141 = vmatpush.xpose.msra.mxu0 0.0
    %1142 = vmatpush.xpose.msra.mxu0 0.0
    %1143 = vmatpush.xpose.msra.mxu0 0.0
    %1144 = vmatpush.xpose.msra.mxu0 0.0
    %1145 = vmatpush.xpose.msra.mxu0 0.0
    %1146 = vmatpush.xpose.msra.mxu0 %v1129
    %1147 = vmatmul.f32.gmra.mxu0 %v1127
    %v1148 = vpop.f32.mrf.mxu0
    %v1149 = vadd.f32 %v170, %v1148
    %1150 = vdwg.mxu0
    %1151 = vrot.lane.b32.xlu0 %v1016, 120
    %v1152 = vpop.permute.xlu0 %1151
    %v1153 = vsel %vm184, %v1016, 0
    %v1155 = vsel %vm184, %v1152, 0
    %1157 = vmatpush.xpose.msra.mxu0 0.0
    %1158 = vmatpush.xpose.msra.mxu0 0.0
    %1159 = vmatpush.xpose.msra.mxu0 0.0
    %1160 = vmatpush.xpose.msra.mxu0 0.0
    %1161 = vmatpush.xpose.msra.mxu0 0.0
    %1162 = vmatpush.xpose.msra.mxu0 0.0
    %1163 = vmatpush.xpose.msra.mxu0 0.0
    %1164 = vmatpush.xpose.msra.mxu0 0.0
    %1165 = vmatpush.xpose.msra.mxu0 0.0
    %1166 = vmatpush.xpose.msra.mxu0 0.0
    %1167 = vmatpush.xpose.msra.mxu0 0.0
    %1168 = vmatpush.xpose.msra.mxu0 0.0
    %1169 = vmatpush.xpose.msra.mxu0 0.0
    %1170 = vmatpush.xpose.msra.mxu0 0.0
    %1171 = vmatpush.xpose.msra.mxu0 0.0
    %1172 = vmatpush.xpose.msra.mxu0 %v1155
    %1173 = vmatmul.f32.gmra.mxu0 %v1153
    %v1174 = vpop.f32.mrf.mxu0
    %v1175 = vadd.f32 %v171, %v1174
    %1176 = vdwg.mxu0
    %1177 = vrot.lane.b32.xlu0 %v1018, 120
    %v1178 = vpop.permute.xlu0 %1177
    %v1179 = vsel %vm184, %v1018, 0
    %v1181 = vsel %vm184, %v1178, 0
    %1183 = vmatpush.xpose.msra.mxu0 0.0
    %1184 = vmatpush.xpose.msra.mxu0 0.0
    %1185 = vmatpush.xpose.msra.mxu0 0.0
    %1186 = vmatpush.xpose.msra.mxu0 0.0
    %1187 = vmatpush.xpose.msra.mxu0 0.0
    %1188 = vmatpush.xpose.msra.mxu0 0.0
    %1189 = vmatpush.xpose.msra.mxu0 0.0
    %1190 = vmatpush.xpose.msra.mxu0 0.0
    %1191 = vmatpush.xpose.msra.mxu0 0.0
    %1192 = vmatpush.xpose.msra.mxu0 0.0
    %1193 = vmatpush.xpose.msra.mxu0 0.0
    %1194 = vmatpush.xpose.msra.mxu0 0.0
    %1195 = vmatpush.xpose.msra.mxu0 0.0
    %1196 = vmatpush.xpose.msra.mxu0 0.0
    %1197 = vmatpush.xpose.msra.mxu0 0.0
    %1198 = vmatpush.xpose.msra.mxu0 %v1181
    %1199 = vmatmul.f32.gmra.mxu0 %v1179
    %v1200 = vpop.f32.mrf.mxu0
    %v1201 = vadd.f32 %v172, %v1200
    %1202 = vdwg.mxu0
    %1203 = vrot.lane.b32.xlu0 %v1020, 120
    %v1204 = vpop.permute.xlu0 %1203
    %v1205 = vsel %vm184, %v1020, 0
    %v1207 = vsel %vm184, %v1204, 0
    %1209 = vmatpush.xpose.msra.mxu0 0.0
    %1210 = vmatpush.xpose.msra.mxu0 0.0
    %1211 = vmatpush.xpose.msra.mxu0 0.0
    %1212 = vmatpush.xpose.msra.mxu0 0.0
    %1213 = vmatpush.xpose.msra.mxu0 0.0
    %1214 = vmatpush.xpose.msra.mxu0 0.0
    %1215 = vmatpush.xpose.msra.mxu0 0.0
    %1216 = vmatpush.xpose.msra.mxu0 0.0
    %1217 = vmatpush.xpose.msra.mxu0 0.0
    %1218 = vmatpush.xpose.msra.mxu0 0.0
    %1219 = vmatpush.xpose.msra.mxu0 0.0
    %1220 = vmatpush.xpose.msra.mxu0 0.0
    %1221 = vmatpush.xpose.msra.mxu0 0.0
    %1222 = vmatpush.xpose.msra.mxu0 0.0
    %1223 = vmatpush.xpose.msra.mxu0 0.0
    %1224 = vmatpush.xpose.msra.mxu0 %v1207
    %1225 = vmatmul.f32.gmra.mxu0 %v1205
    %v1226 = vpop.f32.mrf.mxu0
    %v1227 = vadd.f32 %v173, %v1226
    %1228 = vdwg.mxu0
    %v1229 = vsel %vm184, %v1045, -inf
    %1230 = vmax.xlane.f32.xlu0 %v1229
    %v1231 = vpop.xlane.xlu0 %1230
    %v1232 = vsel %vm184, %v1071, -inf
    %1233 = vmax.xlane.f32.xlu0 %v1232
    %v1234 = vpop.xlane.xlu0 %1233
    %v1235 = vsel %vm184, %v1097, -inf
    %1236 = vmax.xlane.f32.xlu0 %v1235
    %v1237 = vpop.xlane.xlu0 %1236
    %v1238 = vsel %vm184, %v1123, -inf
    %1239 = vmax.xlane.f32.xlu0 %v1238
    %v1240 = vpop.xlane.xlu0 %1239
    %v1241 = vsel %vm184, %v1149, -inf
    %1242 = vmax.xlane.f32.xlu0 %v1241
    %v1243 = vpop.xlane.xlu0 %1242
    %v1244 = vsel %vm184, %v1175, -inf
    %1245 = vmax.xlane.f32.xlu0 %v1244
    %v1246 = vpop.xlane.xlu0 %1245
    %v1247 = vsel %vm184, %v1201, -inf
    %1248 = vmax.xlane.f32.xlu0 %v1247
    %v1249 = vpop.xlane.xlu0 %1248
    %v1250 = vsel %vm184, %v1227, -inf
    %1251 = vmax.xlane.f32.xlu0 %v1250
    %v1252 = vpop.xlane.xlu0 %1251
    %v1253 = vsub.f32 %v1045, %v1231
    %v1254 = vsub.f32 %v1071, %v1234
    %v1255 = vsub.f32 %v1097, %v1237
    %v1256 = vsub.f32 %v1123, %v1240
    %v1257 = vsub.f32 %v1149, %v1243
    %v1258 = vsub.f32 %v1175, %v1246
    %v1259 = vsub.f32 %v1201, %v1249
    %v1260 = vsub.f32 %v1227, %v1252
    %v1261 = vmul.f32 %v1253, 1.442695
    %v1262 = vpow.pop %v1261
    %v1263 = vmul.f32 %v1254, 1.442695
    %v1264 = vpow.pop %v1263
    %v1265 = vmul.f32 %v1255, 1.442695
    %v1266 = vpow.pop %v1265
    %v1267 = vmul.f32 %v1256, 1.442695
    %v1268 = vpow.pop %v1267
    %v1269 = vmul.f32 %v1257, 1.442695
    %v1270 = vpow.pop %v1269
    %v1271 = vmul.f32 %v1258, 1.442695
    %v1272 = vpow.pop %v1271
    %v1273 = vmul.f32 %v1259, 1.442695
    %v1274 = vpow.pop %v1273
    %v1275 = vmul.f32 %v1260, 1.442695
    %v1276 = vpow.pop %v1275
    %v1277 = vsel %vm184, %v1262, 0.0
    %1278 = vadd.xlane.f32.xlu0 %v1277
    %v1279 = vpop.xlane.xlu0 %1278
    %v1280 = vsel %vm184, %v1264, 0.0
    %1281 = vadd.xlane.f32.xlu0 %v1280
    %v1282 = vpop.xlane.xlu0 %1281
    %v1283 = vsel %vm184, %v1266, 0.0
    %1284 = vadd.xlane.f32.xlu0 %v1283
    %v1285 = vpop.xlane.xlu0 %1284
    %v1286 = vsel %vm184, %v1268, 0.0
    %1287 = vadd.xlane.f32.xlu0 %v1286
    %v1288 = vpop.xlane.xlu0 %1287
    %v1289 = vsel %vm184, %v1270, 0.0
    %1290 = vadd.xlane.f32.xlu0 %v1289
    %v1291 = vpop.xlane.xlu0 %1290
    %v1292 = vsel %vm184, %v1272, 0.0
    %1293 = vadd.xlane.f32.xlu0 %v1292
    %v1294 = vpop.xlane.xlu0 %1293
    %v1295 = vsel %vm184, %v1274, 0.0
    %1296 = vadd.xlane.f32.xlu0 %v1295
    %v1297 = vpop.xlane.xlu0 %1296
    %v1298 = vsel %vm184, %v1276, 0.0
    %1299 = vadd.xlane.f32.xlu0 %v1298
    %v1300 = vpop.xlane.xlu0 %1299
    %v1301 = vrcp.pop %v1279
    %v1302 = vrcp.pop %v1282
    %v1303 = vrcp.pop %v1285
    %v1304 = vrcp.pop %v1288
    %v1305 = vrcp.pop %v1291
    %v1306 = vrcp.pop %v1294
    %v1307 = vrcp.pop %v1297
    %v1308 = vrcp.pop %v1300
    %v1309 = vmul.f32 %v1262, %v1301
    %v1310 = vmul.f32 %v1264, %v1302
    %v1311 = vmul.f32 %v1266, %v1303
    %v1312 = vmul.f32 %v1268, %v1304
    %v1313 = vmul.f32 %v1270, %v1305
    %v1314 = vmul.f32 %v1272, %v1306
    %v1315 = vmul.f32 %v1274, %v1307
    %v1316 = vmul.f32 %v1276, %v1308
    %1317 = vrot.lane.b32.xlu0 %v1002, 112
    %v1318 = vpop.permute.xlu0 %1317
    %v1321 = vsel %vm184, %v1309, 0
    %1323 = vmatpush.msra.mxu0 0.0
    %1324 = vmatpush.msra.mxu0 0.0
    %1325 = vmatpush.msra.mxu0 0.0
    %1326 = vmatpush.msra.mxu0 0.0
    %1327 = vmatpush.msra.mxu0 0.0
    %1328 = vmatpush.msra.mxu0 0.0
    %1329 = vmatpush.msra.mxu0 0.0
    %1330 = vmatpush.msra.mxu0 0.0
    %1331 = vmatpush.msra.mxu0 0.0
    %1332 = vmatpush.msra.mxu0 0.0
    %1333 = vmatpush.msra.mxu0 0.0
    %1334 = vmatpush.msra.mxu0 0.0
    %1335 = vmatpush.msra.mxu0 0.0
    %1336 = vmatpush.msra.mxu0 0.0
    %1337 = vmatpush.msra.mxu0 0.0
    %1338 = vmatpush.msra.mxu0 %v1318
    %1339 = vmatmul.f32.gmra.mxu0 %v1321
    %v1340 = vpop.f32.mrf.mxu0
    %v1341 = vadd.f32 0.0, %v1340
    %1342 = vdwg.mxu0
    %1343 = vrot.lane.b32.xlu0 %v1005, 112
    %v1344 = vpop.permute.xlu0 %1343
    %v1347 = vsel %vm184, %v1310, 0
    %1349 = vmatpush.msra.mxu0 0.0
    %1350 = vmatpush.msra.mxu0 0.0
    %1351 = vmatpush.msra.mxu0 0.0
    %1352 = vmatpush.msra.mxu0 0.0
    %1353 = vmatpush.msra.mxu0 0.0
    %1354 = vmatpush.msra.mxu0 0.0
    %1355 = vmatpush.msra.mxu0 0.0
    %1356 = vmatpush.msra.mxu0 0.0
    %1357 = vmatpush.msra.mxu0 0.0
    %1358 = vmatpush.msra.mxu0 0.0
    %1359 = vmatpush.msra.mxu0 0.0
    %1360 = vmatpush.msra.mxu0 0.0
    %1361 = vmatpush.msra.mxu0 0.0
    %1362 = vmatpush.msra.mxu0 0.0
    %1363 = vmatpush.msra.mxu0 0.0
    %1364 = vmatpush.msra.mxu0 %v1344
    %1365 = vmatmul.f32.gmra.mxu0 %v1347
    %v1366 = vpop.f32.mrf.mxu0
    %v1367 = vadd.f32 0.0, %v1366
    %1368 = vdwg.mxu0
    %1369 = vrot.lane.b32.xlu0 %v1010, 112
    %v1370 = vpop.permute.xlu0 %1369
    %v1373 = vsel %vm184, %v1311, 0
    %1375 = vmatpush.msra.mxu0 0.0
    %1376 = vmatpush.msra.mxu0 0.0
    %1377 = vmatpush.msra.mxu0 0.0
    %1378 = vmatpush.msra.mxu0 0.0
    %1379 = vmatpush.msra.mxu0 0.0
    %1380 = vmatpush.msra.mxu0 0.0
    %1381 = vmatpush.msra.mxu0 0.0
    %1382 = vmatpush.msra.mxu0 0.0
    %1383 = vmatpush.msra.mxu0 0.0
    %1384 = vmatpush.msra.mxu0 0.0
    %1385 = vmatpush.msra.mxu0 0.0
    %1386 = vmatpush.msra.mxu0 0.0
    %1387 = vmatpush.msra.mxu0 0.0
    %1388 = vmatpush.msra.mxu0 0.0
    %1389 = vmatpush.msra.mxu0 0.0
    %1390 = vmatpush.msra.mxu0 %v1370
    %1391 = vmatmul.f32.gmra.mxu0 %v1373
    %v1392 = vpop.f32.mrf.mxu0
    %v1393 = vadd.f32 0.0, %v1392
    %1394 = vdwg.mxu0
    %1395 = vrot.lane.b32.xlu0 %v1012, 112
    %v1396 = vpop.permute.xlu0 %1395
    %v1399 = vsel %vm184, %v1312, 0
    %1401 = vmatpush.msra.mxu0 0.0
    %1402 = vmatpush.msra.mxu0 0.0
    %1403 = vmatpush.msra.mxu0 0.0
    %1404 = vmatpush.msra.mxu0 0.0
    %1405 = vmatpush.msra.mxu0 0.0
    %1406 = vmatpush.msra.mxu0 0.0
    %1407 = vmatpush.msra.mxu0 0.0
    %1408 = vmatpush.msra.mxu0 0.0
    %1409 = vmatpush.msra.mxu0 0.0
    %1410 = vmatpush.msra.mxu0 0.0
    %1411 = vmatpush.msra.mxu0 0.0
    %1412 = vmatpush.msra.mxu0 0.0
    %1413 = vmatpush.msra.mxu0 0.0
    %1414 = vmatpush.msra.mxu0 0.0
    %1415 = vmatpush.msra.mxu0 0.0
    %1416 = vmatpush.msra.mxu0 %v1396
    %1417 = vmatmul.f32.gmra.mxu0 %v1399
    %v1418 = vpop.f32.mrf.mxu0
    %v1419 = vadd.f32 0.0, %v1418
    %1420 = vdwg.mxu0
    %1421 = vrot.lane.b32.xlu0 %v1014, 112
    %v1422 = vpop.permute.xlu0 %1421
    %v1425 = vsel %vm184, %v1313, 0
    %1427 = vmatpush.msra.mxu0 0.0
    %1428 = vmatpush.msra.mxu0 0.0
    %1429 = vmatpush.msra.mxu0 0.0
    %1430 = vmatpush.msra.mxu0 0.0
    %1431 = vmatpush.msra.mxu0 0.0
    %1432 = vmatpush.msra.mxu0 0.0
    %1433 = vmatpush.msra.mxu0 0.0
    %1434 = vmatpush.msra.mxu0 0.0
    %1435 = vmatpush.msra.mxu0 0.0
    %1436 = vmatpush.msra.mxu0 0.0
    %1437 = vmatpush.msra.mxu0 0.0
    %1438 = vmatpush.msra.mxu0 0.0
    %1439 = vmatpush.msra.mxu0 0.0
    %1440 = vmatpush.msra.mxu0 0.0
    %1441 = vmatpush.msra.mxu0 0.0
    %1442 = vmatpush.msra.mxu0 %v1422
    %1443 = vmatmul.f32.gmra.mxu0 %v1425
    %v1444 = vpop.f32.mrf.mxu0
    %v1445 = vadd.f32 0.0, %v1444
    %1446 = vdwg.mxu0
    %1447 = vrot.lane.b32.xlu0 %v1016, 112
    %v1448 = vpop.permute.xlu0 %1447
    %v1451 = vsel %vm184, %v1314, 0
    %1453 = vmatpush.msra.mxu0 0.0
    %1454 = vmatpush.msra.mxu0 0.0
    %1455 = vmatpush.msra.mxu0 0.0
    %1456 = vmatpush.msra.mxu0 0.0
    %1457 = vmatpush.msra.mxu0 0.0
    %1458 = vmatpush.msra.mxu0 0.0
    %1459 = vmatpush.msra.mxu0 0.0
    %1460 = vmatpush.msra.mxu0 0.0
    %1461 = vmatpush.msra.mxu0 0.0
    %1462 = vmatpush.msra.mxu0 0.0
    %1463 = vmatpush.msra.mxu0 0.0
    %1464 = vmatpush.msra.mxu0 0.0
    %1465 = vmatpush.msra.mxu0 0.0
    %1466 = vmatpush.msra.mxu0 0.0
    %1467 = vmatpush.msra.mxu0 0.0
    %1468 = vmatpush.msra.mxu0 %v1448
    %1469 = vmatmul.f32.gmra.mxu0 %v1451
    %v1470 = vpop.f32.mrf.mxu0
    %v1471 = vadd.f32 0.0, %v1470
    %1472 = vdwg.mxu0
    %1473 = vrot.lane.b32.xlu0 %v1018, 112
    %v1474 = vpop.permute.xlu0 %1473
    %v1477 = vsel %vm184, %v1315, 0
    %1479 = vmatpush.msra.mxu0 0.0
    %1480 = vmatpush.msra.mxu0 0.0
    %1481 = vmatpush.msra.mxu0 0.0
    %1482 = vmatpush.msra.mxu0 0.0
    %1483 = vmatpush.msra.mxu0 0.0
    %1484 = vmatpush.msra.mxu0 0.0
    %1485 = vmatpush.msra.mxu0 0.0
    %1486 = vmatpush.msra.mxu0 0.0
    %1487 = vmatpush.msra.mxu0 0.0
    %1488 = vmatpush.msra.mxu0 0.0
    %1489 = vmatpush.msra.mxu0 0.0
    %1490 = vmatpush.msra.mxu0 0.0
    %1491 = vmatpush.msra.mxu0 0.0
    %1492 = vmatpush.msra.mxu0 0.0
    %1493 = vmatpush.msra.mxu0 0.0
    %1494 = vmatpush.msra.mxu0 %v1474
    %1495 = vmatmul.f32.gmra.mxu0 %v1477
    %v1496 = vpop.f32.mrf.mxu0
    %v1497 = vadd.f32 0.0, %v1496
    %1498 = vdwg.mxu0
    %1499 = vrot.lane.b32.xlu0 %v1020, 112
    %v1500 = vpop.permute.xlu0 %1499
    %v1503 = vsel %vm184, %v1316, 0
    %1505 = vmatpush.msra.mxu0 0.0
    %1506 = vmatpush.msra.mxu0 0.0
    %1507 = vmatpush.msra.mxu0 0.0
    %1508 = vmatpush.msra.mxu0 0.0
    %1509 = vmatpush.msra.mxu0 0.0
    %1510 = vmatpush.msra.mxu0 0.0
    %1511 = vmatpush.msra.mxu0 0.0
    %1512 = vmatpush.msra.mxu0 0.0
    %1513 = vmatpush.msra.mxu0 0.0
    %1514 = vmatpush.msra.mxu0 0.0
    %1515 = vmatpush.msra.mxu0 0.0
    %1516 = vmatpush.msra.mxu0 0.0
    %1517 = vmatpush.msra.mxu0 0.0
    %1518 = vmatpush.msra.mxu0 0.0
    %1519 = vmatpush.msra.mxu0 0.0
    %1520 = vmatpush.msra.mxu0 %v1500
    %1521 = vmatmul.f32.gmra.mxu0 %v1503
    %v1522 = vpop.f32.mrf.mxu0
    %v1523 = vadd.f32 0.0, %v1522
    %1524 = vdwg.mxu0
    %1527 = vrot.lane.b32.xlu0 %v1393, 8
    %v1528 = vpop.permute.xlu0 %1527
    %1529 = vrot.lane.b32.xlu0 %v1419, 8
    %v1530 = vpop.permute.xlu0 %1529
    %1535 = vrot.lane.b32.xlu0 %v1445, 16
    %v1536 = vpop.permute.xlu0 %1535
    %1537 = vrot.lane.b32.xlu0 %v1471, 16
    %v1538 = vpop.permute.xlu0 %1537
    %1543 = vrot.lane.b32.xlu0 %v1497, 24
    %v1544 = vpop.permute.xlu0 %1543
    %1545 = vrot.lane.b32.xlu0 %v1523, 24
    %v1546 = vpop.permute.xlu0 %1545
    %v1549 = vsel %vm184, %v1341, %v1528
    %v1550 = vsel %vm184, %v1367, %v1530
    %v1551 = vsel %vm713, %v1549, %v1536
    %v1552 = vsel %vm713, %v1550, %v1538
    %v1553 = vsel %vm716, %v1551, %v1544
    %v1554 = vsel %vm716, %v1552, %v1546
    %v1555 = vperm.slane %v974, 0
    %1560 = vrot.lane.b32.xlu0 %v963, 32
    %v1561 = vpop.permute.xlu0 %1560
    %1562 = vrot.lane.b32.xlu0 %v965, 32
    %v1563 = vpop.permute.xlu0 %1562
    %1564 = vrot.lane.b32.xlu0 %v967, 32
    %v1565 = vpop.permute.xlu0 %1564
    %1566 = vrot.lane.b32.xlu0 %v969, 32
    %v1567 = vpop.permute.xlu0 %1566
    %v1573 = vsel %vm44, %v1553, 0
    %v1576 = vsel %vm44, %v1554, 0
    %1578 = vmatpush.msra.mxu0 0.0
    %1579 = vmatpush.msra.mxu0 0.0
    %1580 = vmatpush.msra.mxu0 0.0
    %1581 = vmatpush.msra.mxu0 0.0
    %1582 = vmatpush.msra.mxu0 0.0
    %1583 = vmatpush.msra.mxu0 0.0
    %1584 = vmatpush.msra.mxu0 0.0
    %1585 = vmatpush.msra.mxu0 0.0
    %1586 = vmatpush.msra.mxu0 0.0
    %1587 = vmatpush.msra.mxu0 0.0
    %1588 = vmatpush.msra.mxu0 0.0
    %1589 = vmatpush.msra.mxu0 0.0
    %1590 = vmatpush.msra.mxu0 %v1567
    %1591 = vmatpush.msra.mxu0 %v1565
    %1592 = vmatpush.msra.mxu0 %v1563
    %1593 = vmatpush.msra.mxu0 %v1561
    %1594 = vmatmul.f32.gmra.mxu0 %v1573
    %v1595 = vpop.f32.mrf.mxu0
    %v1596 = vadd.f32 %v1555, %v1595
    %1597 = vmatmul.f32.gmra.mxu0 %v1576
    %v1598 = vpop.f32.mrf.mxu0
    %v1599 = vadd.f32 %v1555, %v1598
    %1600 = vdwg.mxu0
    %v1601 = vadd.f32 %v960, %v1596
    %v1602 = vadd.f32 %v961, %v1599
    %v1603 = vsel %vm44, %v1601, 0.0
    %1604 = vadd.xlane.f32.xlu0 %v1603
    %v1605 = vpop.xlane.xlu0 %1604
    %v1606 = vsel %vm44, %v1602, 0.0
    %1607 = vadd.xlane.f32.xlu0 %v1606
    %v1608 = vpop.xlane.xlu0 %1607
    %v1609 = vmul.f32 %v1605, %v57
    %v1610 = vmul.f32 %v1608, %v57
    %v1611 = vsub.f32 %v1601, %v1609
    %v1612 = vsub.f32 %v1602, %v1610
    %v1613 = vmul.f32 %v1611, %v1611
    %v1614 = vmul.f32 %v1612, %v1612
    %v1615 = vsel %vm44, %v1613, 0.0
    %1616 = vadd.xlane.f32.xlu0 %v1615
    %v1617 = vpop.xlane.xlu0 %1616
    %v1618 = vsel %vm44, %v1614, 0.0
    %1619 = vadd.xlane.f32.xlu0 %v1618
    %v1620 = vpop.xlane.xlu0 %1619
    %v1621 = vmul.f32 %v1617, %v57
    %v1622 = vmul.f32 %v1620, %v57
    %v1623 = vadd.f32 %v1621, 1e-12
    %v1624 = vadd.f32 %v1622, 1e-12
    %v1625 = vrsqrt.pop %v1623
    %v1626 = vmul.f32 %v1625, %v1623
    %v1627 = vmul.f32 %v1626, %v1625
    %v1628 = vmul.f32 0.5, %v1627
    %v1629 = vsub.f32 1.5, %v1628
    %v1630 = vmul.f32 %v1625, %v1629
    %vm1631 = vweird.f32 %v1623
    %vm1632 = vweird.f32 %v1625
    %vm1633 = vmor %vm1631, %vm1632
    %v1634 = vsel %vm1633, %v1625, %v1630
    %v1635 = vrsqrt.pop %v1624
    %v1636 = vmul.f32 %v1635, %v1624
    %v1637 = vmul.f32 %v1636, %v1635
    %v1638 = vmul.f32 0.5, %v1637
    %v1639 = vsub.f32 1.5, %v1638
    %v1640 = vmul.f32 %v1635, %v1639
    %vm1641 = vweird.f32 %v1624
    %vm1642 = vweird.f32 %v1635
    %vm1643 = vmor %vm1641, %vm1642
    %v1644 = vsel %vm1643, %v1635, %v1640
    %v1645 = vmul.f32 %v1611, %v1634
    %v1646 = vmul.f32 %v1612, %v1644
    %v1647 = vperm.slane %v974, 1
    %v1648 = vmul.f32 %v1645, %v1647
    %v1649 = vmul.f32 %v1646, %v1647
    %v1650 = vperm.slane %v974, 2
    %v1651 = vadd.f32 %v1648, %v1650
    %v1652 = vadd.f32 %v1649, %v1650
    %v1653 = vperm.slane %v972, 1
    %1654 = vrot.lane.b32.xlu0 %v976, 32
    %v1655 = vpop.permute.xlu0 %1654
    %1656 = vrot.lane.b32.xlu0 %v1653, 32
    %v1657 = vpop.permute.xlu0 %1656
    %v1658 = vsel %vm44, %v1655, %v1657
    %v1661 = vsel %vm44, %v1651, 0
    %v1664 = vsel %vm44, %v1652, 0
    %1666 = vmatpush.msra.mxu0 0.0
    %1667 = vmatpush.msra.mxu0 0.0
    %1668 = vmatpush.msra.mxu0 0.0
    %1669 = vmatpush.msra.mxu0 0.0
    %1670 = vmatpush.msra.mxu0 0.0
    %1671 = vmatpush.msra.mxu0 0.0
    %1672 = vmatpush.msra.mxu0 0.0
    %1673 = vmatpush.msra.mxu0 0.0
    %1674 = vmatpush.msra.mxu0 0.0
    %1675 = vmatpush.msra.mxu0 0.0
    %1676 = vmatpush.msra.mxu0 0.0
    %1677 = vmatpush.msra.mxu0 0.0
    %1678 = vmatpush.msra.mxu0 %v970
    %1679 = vmatpush.msra.mxu0 %v968
    %1680 = vmatpush.msra.mxu0 %v966
    %1681 = vmatpush.msra.mxu0 %v964
    %1682 = vmatmul.f32.gmra.mxu0 %v1661
    %v1683 = vpop.f32.mrf.mxu0
    %v1684 = vadd.f32 %v1658, %v1683
    %1685 = vmatmul.f32.gmra.mxu0 %v1664
    %v1686 = vpop.f32.mrf.mxu0
    %v1687 = vadd.f32 %v1658, %v1686
    %1688 = vdwg.mxu0
    %v1689 = vmul.f32 %v1684, 0.5
    %v1690 = vmul.f32 %v1687, 0.5
    %v1691 = vmul.f32 %v1684, 0.044715
    %v1692 = vmul.f32 %v1687, 0.044715
    %v1693 = vmul.f32 %v1691, %v1684
    %v1694 = vmul.f32 %v1692, %v1687
    %v1695 = vmul.f32 %v1693, %v1684
    %v1696 = vmul.f32 %v1694, %v1687
    %v1697 = vadd.f32 %v1684, %v1695
    %v1698 = vadd.f32 %v1687, %v1696
    %v1699 = vmul.f32 %v1697, 0.7978846
    %v1700 = vmul.f32 %v1698, 0.7978846
    %v1701 = vtanh.pop %v1699
    %v1702 = vtanh.pop %v1700
    %v1703 = vadd.f32 %v1701, 1.0
    %v1704 = vadd.f32 %v1702, 1.0
    %v1705 = vmul.f32 %v1689, %v1703
    %v1706 = vmul.f32 %v1690, %v1704
    %s1707 = scalar_lea.vmem %s6, 64
    %v1708 = vld [vmem:[%s1707] sm:$0xff]
    %v1709 = vld [vmem:[%s1707 + $0x8] sm:$0xff]
    %v1710 = vld [vmem:[%s1707 + $0x10] sm:$0xff]
    %v1711 = vld [vmem:[%s1707 + $0x18] sm:$0xff]
    %v1712 = vld [vmem:[%s1707 + $0x20] sm:$0xff]
    %v1713 = vld [vmem:[%s1707 + $0x28] sm:$0xff]
    %v1714 = vld [vmem:[%s1707 + $0x30] sm:$0xff]
    %v1715 = vld [vmem:[%s1707 + $0x38] sm:$0xff]
    %v1716 = vperm.slane %v974, 3
    %v1718 = vsel %vm880, %v1705, 0
    %v1721 = vsel %vm880, %v1706, 0
    %1723 = vmatpush.msra.mxu0 0.0
    %1724 = vmatpush.msra.mxu0 0.0
    %1725 = vmatpush.msra.mxu0 0.0
    %1726 = vmatpush.msra.mxu0 0.0
    %1727 = vmatpush.msra.mxu0 0.0
    %1728 = vmatpush.msra.mxu0 0.0
    %1729 = vmatpush.msra.mxu0 0.0
    %1730 = vmatpush.msra.mxu0 0.0
    %1731 = vmatpush.msra.mxu0 %v1715
    %1732 = vmatpush.msra.mxu0 %v1714
    %1733 = vmatpush.msra.mxu0 %v1713
    %1734 = vmatpush.msra.mxu0 %v1712
    %1735 = vmatpush.msra.mxu0 %v1711
    %1736 = vmatpush.msra.mxu0 %v1710
    %1737 = vmatpush.msra.mxu0 %v1709
    %1738 = vmatpush.msra.mxu0 %v1708
    %1739 = vmatmul.f32.gmra.mxu0 %v1718
    %v1740 = vpop.f32.mrf.mxu0
    %v1741 = vadd.f32 %v1716, %v1740
    %1742 = vmatmul.f32.gmra.mxu0 %v1721
    %v1743 = vpop.f32.mrf.mxu0
    %v1744 = vadd.f32 %v1716, %v1743
    %1745 = vdwg.mxu0
    %v1746 = vadd.f32 %v1651, %v1741
    %v1747 = vadd.f32 %v1652, %v1744
    %v1748 = vsel %vm44, %v1746, 0.0
    %1749 = vadd.xlane.f32.xlu0 %v1748
    %v1750 = vpop.xlane.xlu0 %1749
    %v1751 = vsel %vm44, %v1747, 0.0
    %1752 = vadd.xlane.f32.xlu0 %v1751
    %v1753 = vpop.xlane.xlu0 %1752
    %v1754 = vmul.f32 %v1750, %v57
    %v1755 = vmul.f32 %v1753, %v57
    %v1756 = vsub.f32 %v1746, %v1754
    %v1757 = vsub.f32 %v1747, %v1755
    %v1758 = vmul.f32 %v1756, %v1756
    %v1759 = vmul.f32 %v1757, %v1757
    %v1760 = vsel %vm44, %v1758, 0.0
    %1761 = vadd.xlane.f32.xlu0 %v1760
    %v1762 = vpop.xlane.xlu0 %1761
    %v1763 = vsel %vm44, %v1759, 0.0
    %1764 = vadd.xlane.f32.xlu0 %v1763
    %v1765 = vpop.xlane.xlu0 %1764
    %v1766 = vmul.f32 %v1762, %v57
    %v1767 = vmul.f32 %v1765, %v57
    %v1768 = vadd.f32 %v1766, 1e-12
    %v1769 = vadd.f32 %v1767, 1e-12
    %v1770 = vrsqrt.pop %v1768
    %v1771 = vmul.f32 %v1770, %v1768
    %v1772 = vmul.f32 %v1771, %v1770
    %v1773 = vmul.f32 0.5, %v1772
    %v1774 = vsub.f32 1.5, %v1773
    %v1775 = vmul.f32 %v1770, %v1774
    %vm1776 = vweird.f32 %v1768
    %vm1777 = vweird.f32 %v1770
    %vm1778 = vmor %vm1776, %vm1777
    %v1779 = vsel %vm1778, %v1770, %v1775
    %v1780 = vrsqrt.pop %v1769
    %v1781 = vmul.f32 %v1780, %v1769
    %v1782 = vmul.f32 %v1781, %v1780
    %v1783 = vmul.f32 0.5, %v1782
    %v1784 = vsub.f32 1.5, %v1783
    %v1785 = vmul.f32 %v1780, %v1784
    %vm1786 = vweird.f32 %v1769
    %vm1787 = vweird.f32 %v1780
    %vm1788 = vmor %vm1786, %vm1787
    %v1789 = vsel %vm1788, %v1780, %v1785
    %v1790 = vmul.f32 %v1756, %v1779
    %v1791 = vmul.f32 %v1757, %v1789
    %v1792 = vperm.slane %v974, 4
    %v1793 = vmul.f32 %v1790, %v1792
    %v1794 = vmul.f32 %v1791, %v1792
    %v1795 = vperm.slane %v974, 5
    %v1796 = vadd.f32 %v1793, %v1795
    %v1797 = vadd.f32 %v1794, %v1795
    %v1798 = vld [vmem:[%s3] sm:$0x1]
    %v1800 = vsel %vm44, %v1798, 0
    %v1803 = vsel %vm44, %v1796, 0
    %v1806 = vsel %vm44, %v1797, 0
    %1808 = vmatpush.xpose.msra.mxu0 0.0
    %1809 = vmatpush.xpose.msra.mxu0 0.0
    %1810 = vmatpush.xpose.msra.mxu0 0.0
    %1811 = vmatpush.xpose.msra.mxu0 0.0
    %1812 = vmatpush.xpose.msra.mxu0 0.0
    %1813 = vmatpush.xpose.msra.mxu0 0.0
    %1814 = vmatpush.xpose.msra.mxu0 0.0
    %1815 = vmatpush.xpose.msra.mxu0 0.0
    %1816 = vmatpush.xpose.msra.mxu0 0.0
    %1817 = vmatpush.xpose.msra.mxu0 0.0
    %1818 = vmatpush.xpose.msra.mxu0 0.0
    %1819 = vmatpush.xpose.msra.mxu0 0.0
    %1820 = vmatpush.xpose.msra.mxu0 0.0
    %1821 = vmatpush.xpose.msra.mxu0 0.0
    %1822 = vmatpush.xpose.msra.mxu0 %v1806
    %1823 = vmatpush.xpose.msra.mxu0 %v1803
    %1824 = vmatmul.f32.gmra.mxu0 %v1800
    %v1825 = vpop.f32.mrf.mxu0
    %v1826 = vadd.f32 0.0, %v1825
    %1827 = vdwg.mxu0
    %v1828 = vld [vmem:[%s2] sm:$0xff]
    %v1829 = vld [vmem:[%s2 + $0x8] sm:$0xff]
    %1830 = vset.pattern.permute.xlu0 32
    %1831 = vperm.xlu0 %1830, %v1798
    %v1832 = vpop.permute.xlu0 %1831
    %v1834 = vperm.slane %v1832, 0
    %v1836 = vsel %vm713, %v1826, 0
    %1838 = vmatpush.msra.mxu0 0.0
    %1839 = vmatpush.msra.mxu0 0.0
    %1840 = vmatpush.msra.mxu0 0.0
    %1841 = vmatpush.msra.mxu0 0.0
    %1842 = vmatpush.msra.mxu0 0.0
    %1843 = vmatpush.msra.mxu0 0.0
    %1844 = vmatpush.msra.mxu0 0.0
    %1845 = vmatpush.msra.mxu0 0.0
    %1846 = vmatpush.msra.mxu0 0.0
    %1847 = vmatpush.msra.mxu0 0.0
    %1848 = vmatpush.msra.mxu0 0.0
    %1849 = vmatpush.msra.mxu0 0.0
    %1850 = vmatpush.msra.mxu0 0.0
    %1851 = vmatpush.msra.mxu0 0.0
    %1852 = vmatpush.msra.mxu0 %v1829
    %1853 = vmatpush.msra.mxu0 %v1828
    %1854 = vmatmul.f32.gmra.mxu0 %v1836
    %v1855 = vpop.f32.mrf.mxu0
    %v1856 = vadd.f32 %v1834, %v1855
    %1857 = vdwg.mxu0
    %v1858 = vxor.u32 %v1856, 2147483648
    %v1859 = vmul.f32 %v1858, 1.442695
    %v1860 = vpow.pop %v1859
    %v1861 = vadd.f32 %v1860, 1.0
    %v1862 = vrcp.pop %v1861
    %v1863 = vmul.f32 %v1861, %v1862
    %v1864 = vsub.f32 1.0, %v1863
    %v1865 = vmul.f32 %v1862, %v1864
    %v1866 = vadd.f32 %v1862, %v1865
    %vm1867 = vweird.f32 %v1861
    %vm1868 = vweird.f32 %v1862
    %vm1869 = vmor %vm1867, %vm1868
    %v1870 = vsel %vm1869, %v1862, %v1866
    %v1871 = vand.u32 2147483647, %v1861
    %vm1872 = vcmp.eq.f32.partialorder %v1871, 8.507059e+37
    %v1873 = vand.u32 %v1861, 2147483648
    %v1874 = vor.u32 1.1754944e-38, %v1873
    %v1875 = vsel %vm1872, %v1874, %v1870
    %v1876 = vmul.f32 1.0, %v1875
    %v1877 = vperm.slane %v1798, 0
    %1878 = vrot.lane.b32.xlu0 %v1877, 95
    %v1879 = vpop.permute.xlu0 %1878
    %v1881 = vmul.f32 %v1876, %v1879
    %vm1882 = vcmask 40960
    %1883 = vst.msk [vmem:[#allocation2] sm:$0x1] %vm1882, %v1881
    // Predicated region
    $region38: #{tpu_custom_call.1} parent=1 // pred_check
      _
    $region39: #{tpu_custom_call.1} parent=1 // pred_check_branch
      %1885 = sbr.rel (0) target = $region41
    $region40: #{tpu_custom_call.1} parent=1 // pred_region
      %1887 = vsyncadd [#allocation3], 0
      %s1889 = sshll.u32 [#allocation2], 4
      %s1890 = int_to_ptr.vmem [resolvable:$true] %s1889
      %s1891 = sshll.u32 %s9, 4
      %s1892 = int_to_ptr.hbm [resolvable:$true] %s1891
      %1894 = dma.vmem_to_hbm [thread:$0]  %s1890, 16, %s1892, [#allocation3]
    $region41: #{tpu_custom_call.1} parent=1 // pred_fallthru
      _
    // Predicated region
    $region42: #{tpu_custom_call.1} parent=1 // pred_check
      _
    $region43: #{tpu_custom_call.1} parent=1 // pred_check_branch
      %1896 = sbr.rel (0) target = $region45
    $region44: #{tpu_custom_call.1} parent=1 // pred_region
      %1898 = dma.done [#allocation3], 16
    $region45: #{tpu_custom_call.1} parent=1 // pred_fallthru
      _
    %1899 = vsyncpa [#allocation3], 1

</llo_original>
